<compile_context>
chip_gen: v5e
topology: v5e:2x2
jax: 0.10.0
libtpu: 0.0.40
codegen_flags: <defaults>
</compile_context>

<pallas_src>
import functools

import jax
import jax.numpy as jnp
from jax.experimental import pallas as pl
from jax.experimental.pallas import tpu as pltpu

LANE = 128  # TPU vreg lane width


def _silu(x):
    return x * jax.nn.sigmoid(x)


def _round_up(n, m):
    return (n + m - 1) // m * m


# ----------------------------- Pallas kernel ------------------------------- #

def crossconv_kernel(x_ref, w1_ref, b1_ref, w2_ref, b2_ref, o_ref,
                     p1_ref, p2_ref, *, k, c_out, add):
    """Fused cv1(1xk)+BN+SiLU -> cv2(kx1)+BN+SiLU (+ optional residual add).

    x_ref   : (H, W, Cin)          input block (batch dim squeezed)
    w1_ref  : (k, Cin, Cmid)       cv1 weights, BN scale pre-folded
    b1_ref  : (1, Cmid)            cv1 folded BN bias
    w2_ref  : (k, Cmid, Cout_p)    cv2 weights (output channels lane-padded)
    b2_ref  : (1, Cout_p)          cv2 folded BN bias (lane-padded)
    o_ref   : (H, W, Cout_p)       output block
    p1_ref  : (H, W, k*Cin)        VMEM im2col patch for cv1 (input dtype)
    p2_ref  : (H, W, k*Cmid)       VMEM im2col patch for cv2 (input dtype)
    """
    H, W, Cin = x_ref.shape
    p = k // 2
    Cmid = w1_ref.shape[2]
    Cop = o_ref.shape[2]

    x = x_ref[...]

    # ---- cv1: 1 x k conv along W as a single im2col matmul -----------------
    # Tap kw sees x shifted by (kw - p) columns; out-of-range columns are the
    # conv zero padding.  Interior written once per tap, only the tiny edge
    # strips are zero-filled (no full-buffer memset).
    for kw in range(k):
        s = kw - p
        sl = slice(kw * Cin, (kw + 1) * Cin)
        if s == 0:
            p1_ref[:, :, sl] = x
        elif s > 0:
            p1_ref[:, :W - s, sl] = x[:, s:, :]
            p1_ref[:, W - s:, sl] = jnp.zeros((H, s, Cin), x.dtype)
        else:
            p1_ref[:, -s:, sl] = x[:, :W + s, :]
            p1_ref[:, :-s, sl] = jnp.zeros((H, -s, Cin), x.dtype)

    acc1 = jnp.dot(p1_ref[...].reshape(H * W, k * Cin),
                   w1_ref[...].reshape(k * Cin, Cmid),
                   preferred_element_type=jnp.float32)
    # BN scale already folded into w1; epilogue = bias + SiLU, cast back to
    # the (possibly bf16) scratch dtype for the second im2col.
    t = _silu(acc1 + b1_ref[...]).reshape(H, W, Cmid).astype(p2_ref.dtype)

    # ---- cv2: k x 1 conv along H, same im2col trick -------------------------
    for kh in range(k):
        s = kh - p
        sl = slice(kh * Cmid, (kh + 1) * Cmid)
        if s == 0:
            p2_ref[:, :, sl] = t
        elif s > 0:
            p2_ref[:H - s, :, sl] = t[s:, :, :]
            p2_ref[H - s:, :, sl] = jnp.zeros((s, W, Cmid), t.dtype)
        else:
            p2_ref[-s:, :, sl] = t[:H + s, :, :]
            p2_ref[:-s, :, sl] = jnp.zeros((-s, W, Cmid), t.dtype)

    acc2 = jnp.dot(p2_ref[...].reshape(H * W, k * Cmid),
                   w2_ref[...].reshape(k * Cmid, Cop),
                   preferred_element_type=jnp.float32)
    y = _silu(acc2 + b2_ref[...])

    # Lane-dense store: Cop is a multiple of 128 (padding sliced off outside).
    o_ref[...] = y.reshape(H, W, Cop).astype(o_ref.dtype)

    if add:   # residual shortcut (only when c1 == c2); padded channels stay 0.
        o_ref[:, :, :c_out] += x.astype(o_ref.dtype)


# ------------------------------ host wrapper -------------------------------- #

def crossconv_forward(params, x_nchw, *, k=3, shortcut=False):
    """CrossConv forward.  x_nchw: (N, C1, H, W)  ->  (N, C2, H, W)."""
    # TODO(synk): stride > 1, groups > 1 and training-mode BatchNorm (batch
    #             statistics) are not implemented; module defaults s=1, g=1
    #             and eval-mode BN are what this kernel reproduces.
    assert k % 2 == 1, "only odd k (module default k=3) is supported"
    w1, b1, w2, b2 = params["w1"], params["b1"], params["w2"], params["b2"]
    N, C1, H, W = x_nchw.shape
    Cmid = w1.shape[-1]
    Cout = w2.shape[-1]
    add = bool(shortcut and (C1 == Cout))

    # Lane-dense output: pad Cout up to a multiple of 128 by zero-padding the
    # (tiny) w2/b2.  The MXU pads its N dimension to 128 regardless, so the
    # extra columns are free compute; the wrapper slices them off afterwards.
    Cop = _round_up(Cout, LANE)
    if Cop != Cout:
        w2p = jnp.pad(w2, ((0, 0), (0, 0), (0, Cop - Cout)))
        b2p = jnp.pad(b2, ((0, Cop - Cout),))
    else:
        w2p, b2p = w2, b2

    x = jnp.transpose(x_nchw, (0, 2, 3, 1))            # NCHW -> NHWC
    xdt = x.dtype

    # Cost estimate from actual dtypes; the intermediate never leaves VMEM.
    flops = 2 * N * H * W * k * (C1 * Cmid + Cmid * Cop)
    transcendentals = N * H * W * (Cmid + Cop)          # sigmoid exp per element
    bytes_accessed = int(
        x.size * x.dtype.itemsize
        + w1.size * w1.dtype.itemsize + b1.size * b1.dtype.itemsize
        + w2p.size * w2p.dtype.itemsize + b2p.size * b2p.dtype.itemsize
        + N * H * W * Cop * xdt.itemsize)

    # VMEM budget: double-buffered in/out blocks + resident weights + the two
    # im2col scratches, with 2x headroom (capped at v7x's 64 MiB per core).
    blk_bytes = (H * W * C1 + H * W * Cop) * xdt.itemsize
    wgt_bytes = 4 * (w1.size + b1.size + w2p.size + b2p.size)
    scr_bytes = (H * W * k * C1 + H * W * k * Cmid) * xdt.itemsize
    need = 2 * (blk_bytes + wgt_bytes) + scr_bytes
    vmem_limit = int(min(64 * 2**20, max(32 * 2**20, 2 * need)))

    # TODO(synk): for production feature-map sizes (e.g. 80x80x256) add an
    #             H-tile grid axis with a +-p row halo (recompute) so per-step
    #             VMEM stays bounded and both v7x TensorCores get work at N=1;
    #             at the small demo shapes a whole image per step is optimal.
    out = pl.pallas_call(
        functools.partial(crossconv_kernel, k=k, c_out=Cout, add=add),
        out_shape=jax.ShapeDtypeStruct((N, H, W, Cop), xdt),
        grid=(N,),
        in_specs=[
            pl.BlockSpec((None, H, W, C1), lambda b: (b, 0, 0, 0)),
            pl.BlockSpec((k, C1, Cmid), lambda b: (0, 0, 0)),
            pl.BlockSpec((1, Cmid), lambda b: (0, 0)),
            pl.BlockSpec((k, Cmid, Cop), lambda b: (0, 0, 0)),
            pl.BlockSpec((1, Cop), lambda b: (0, 0)),
        ],
        out_specs=pl.BlockSpec((None, H, W, Cop), lambda b: (b, 0, 0, 0)),
        scratch_shapes=[
            pltpu.VMEM((H, W, k * C1), xdt),      # cv1 im2col patch
            pltpu.VMEM((H, W, k * Cmid), xdt),    # cv2 im2col patch
        ],
        compiler_params=pltpu.CompilerParams(
            dimension_semantics=("parallel",),
            vmem_limit_bytes=vmem_limit),
        cost_estimate=pl.CostEstimate(flops=flops,
                                      transcendentals=transcendentals,
                                      bytes_accessed=bytes_accessed),
    )(x, w1, b1.reshape(1, Cmid), w2p, b2p.reshape(1, Cop))

    out = out[..., :Cout]                                # drop lane padding
    return jnp.transpose(out, (0, 3, 1, 2))              # NHWC -> NCHW


# --------------------------- parameter construction ------------------------- #

def make_conv_params(key, cin, cout, k):
    """Conv(bias=False)+BN params; BN (eval mode) folded: scale into weights,
    only bias survives.  Weight layout: (k, cin, cout)."""
    kw_, kg, kb, km, kv = jax.random.split(key, 5)
    w = 0.1 * jax.random.normal(kw_, (k, cin, cout), jnp.float32)
    gamma = 1.0 + 0.1 * jax.random.normal(kg, (cout,), jnp.float32)
    beta = 0.1 * jax.random.normal(kb, (cout,), jnp.float32)
    mean = 0.1 * jax.random.normal(km, (cout,), jnp.float32)
    var = jax.random.uniform(kv, (cout,), jnp.float32, 0.5, 1.5)
    eps = 1e-5
    scale = gamma / jnp.sqrt(var + eps)
    bias = beta - mean * scale
    return w * scale, bias          # fold BN scale into weights (per-cout)


def init_crossconv(key, c1, c2, k=3, e=1.0):
    c_ = int(c2 * e)
    k1, k2 = jax.random.split(key)
    w1, b1 = make_conv_params(k1, c1, c_, k)   # cv1: (1, k) conv, taps along W
    w2, b2 = make_conv_params(k2, c_, c2, k)   # cv2: (k, 1) conv, taps along H
    return dict(w1=w1, b1=b1, w2=w2, b2=b2)


# ------------------------- pure-JAX reference (check) ------------------------ #

def crossconv_reference(params, x_nchw, *, k=3, shortcut=False):
    w1, b1, w2, b2 = params["w1"], params["b1"], params["w2"], params["b2"]
    p = k // 2
    x = jnp.transpose(x_nchw, (0, 2, 3, 1))
    t = jax.lax.conv_general_dilated(
        x, w1[None], (1, 1), ((0, 0), (p, p)),
        dimension_numbers=("NHWC", "HWIO", "NHWC"))
    t = _silu(t + b1)
    y = jax.lax.conv_general_dilated(
        t, w2[:, None], (1, 1), ((p, p), (0, 0)),
        dimension_numbers=("NHWC", "HWIO", "NHWC"))
    y = _silu(y + b2)
    if shortcut and x.shape[-1] == y.shape[-1]:
        y = y + x
    return jnp.transpose(y, (0, 3, 1, 2))


# ----------------------------------- main ----------------------------------- #

if __name__ == "__main__":
    B, C1, C2, H, W = 2, 4, 8, 16, 16
    key = jax.random.PRNGKey(0)
    kx, kp1, kp2 = jax.random.split(key, 3)

    # default CrossConv: k=3, s=1, g=1, e=1.0, shortcut=False
    x = jax.random.normal(kx, (B, C1, H, W), jnp.float32)
    params = init_crossconv(kp1, C1, C2)
    out = crossconv_forward(params, x, k=3, shortcut=False)
    jax.block_until_ready(out)
    assert out.shape == (B, C2, H, W), out.shape
    assert bool(jnp.all(jnp.isfinite(out)))
    ref = crossconv_reference(params, x, k=3, shortcut=False)
    assert bool(jnp.allclose(out, ref, rtol=1e-4, atol=1e-4))

    # shortcut variant (add path, requires c1 == c2)
    x2 = jax.random.normal(kx, (B, C2, H, W), jnp.float32)
    params2 = init_crossconv(kp2, C2, C2)
    out2 = crossconv_forward(params2, x2, k=3, shortcut=True)
    jax.block_until_ready(out2)
    assert out2.shape == (B, C2, H, W), out2.shape
    assert bool(jnp.all(jnp.isfinite(out2)))
    ref2 = crossconv_reference(params2, x2, k=3, shortcut=True)
    assert bool(jnp.allclose(out2, ref2, rtol=1e-4, atol=1e-4))

    print("KERNEL_OK")
</pallas_src>

<mosaic_0001>
module attributes {stable_mosaic.version = 11 : i64} {
  func.func @crossconv_kernel(%arg0: i32, %arg1: memref<1x16x16x4xf32, #tpu.memory_space<vmem>>, %arg2: memref<3x4x8xf32, #tpu.memory_space<vmem>>, %arg3: memref<1x8xf32, #tpu.memory_space<vmem>>, %arg4: memref<3x8x128xf32, #tpu.memory_space<vmem>>, %arg5: memref<1x128xf32, #tpu.memory_space<vmem>>, %arg6: memref<1x16x16x128xf32, #tpu.memory_space<vmem>>, %arg7: memref<16x16x12xf32, #tpu.memory_space<vmem>>, %arg8: memref<16x16x24xf32, #tpu.memory_space<vmem>>) attributes {dimension_semantics = [#tpu.dimension_semantics<parallel>], iteration_bounds = array<i64: 2>, scalar_prefetch = 0 : i64, scratch_operands = 2 : i64, tpu.core_type = #tpu.core_type<tc>, window_params = [{transform_indices = @transform_0, window_bounds = array<i64: 1, 16, 16, 4>}, {pipeline_mode = #tpu.pipeline_mode<synchronous>, transform_indices = @transform_1, window_bounds = array<i64: 3, 4, 8>}, {pipeline_mode = #tpu.pipeline_mode<synchronous>, transform_indices = @transform_2, window_bounds = array<i64: 1, 8>}, {pipeline_mode = #tpu.pipeline_mode<synchronous>, transform_indices = @transform_3, window_bounds = array<i64: 3, 8, 128>}, {pipeline_mode = #tpu.pipeline_mode<synchronous>, transform_indices = @transform_4, window_bounds = array<i64: 1, 128>}, {transform_indices = @transform_5, window_bounds = array<i64: 1, 16, 16, 128>}]} {
    %c0 = arith.constant 0 : index
    %c0_0 = arith.constant 0 : index
    %c0_1 = arith.constant 0 : index
    %c0_2 = arith.constant 0 : index
    %0 = vector.load %arg1[%c0, %c0_0, %c0_1, %c0_2] : memref<1x16x16x4xf32, #tpu.memory_space<vmem>>, vector<1x16x16x4xf32>
    %1 = vector.shape_cast %0 : vector<1x16x16x4xf32> to vector<16x16x4xf32>
    %2 = vector.extract_strided_slice %1 {offsets = [0, 0, 0], sizes = [16, 15, 4], strides = [1, 1, 1]} : vector<16x16x4xf32> to vector<16x15x4xf32>
    %c0_3 = arith.constant 0 : index
    %c1 = arith.constant 1 : index
    %c0_4 = arith.constant 0 : index
    %3 = vector.load %arg7[%c0_3, %c1, %c0_4] : memref<16x16x12xf32, #tpu.memory_space<vmem>>, vector<16x15x4xf32>
    tpu.vector_store %arg7[%c0_3, %c1, %c0_4], %2 {strides = array<i32>} : memref<16x16x12xf32, #tpu.memory_space<vmem>>, vector<16x15x4xf32>,
    %cst = arith.constant 0.000000e+00 : f32
    %4 = vector.broadcast %cst : f32 to vector<16x1x4xf32>
    %c0_5 = arith.constant 0 : index
    %c0_6 = arith.constant 0 : index
    %c0_7 = arith.constant 0 : index
    %5 = vector.load %arg7[%c0_5, %c0_6, %c0_7] : memref<16x16x12xf32, #tpu.memory_space<vmem>>, vector<16x1x4xf32>
    tpu.vector_store %arg7[%c0_5, %c0_6, %c0_7], %4 {strides = array<i32>} : memref<16x16x12xf32, #tpu.memory_space<vmem>>, vector<16x1x4xf32>,
    %c0_8 = arith.constant 0 : index
    %c0_9 = arith.constant 0 : index
    %c4 = arith.constant 4 : index
    %6 = vector.load %arg7[%c0_8, %c0_9, %c4] : memref<16x16x12xf32, #tpu.memory_space<vmem>>, vector<16x16x4xf32>
    tpu.vector_store %arg7[%c0_8, %c0_9, %c4], %1 {strides = array<i32>} : memref<16x16x12xf32, #tpu.memory_space<vmem>>, vector<16x16x4xf32>,
    %7 = vector.extract_strided_slice %1 {offsets = [0, 1, 0], sizes = [16, 15, 4], strides = [1, 1, 1]} : vector<16x16x4xf32> to vector<16x15x4xf32>
    %c0_10 = arith.constant 0 : index
    %c0_11 = arith.constant 0 : index
    %c8 = arith.constant 8 : index
    %8 = vector.load %arg7[%c0_10, %c0_11, %c8] : memref<16x16x12xf32, #tpu.memory_space<vmem>>, vector<16x15x4xf32>
    tpu.vector_store %arg7[%c0_10, %c0_11, %c8], %7 {strides = array<i32>} : memref<16x16x12xf32, #tpu.memory_space<vmem>>, vector<16x15x4xf32>,
    %cst_12 = arith.constant 0.000000e+00 : f32
    %9 = vector.broadcast %cst_12 : f32 to vector<16x1x4xf32>
    %c0_13 = arith.constant 0 : index
    %c15 = arith.constant 15 : index
    %c8_14 = arith.constant 8 : index
    %10 = vector.load %arg7[%c0_13, %c15, %c8_14] : memref<16x16x12xf32, #tpu.memory_space<vmem>>, vector<16x1x4xf32>
    tpu.vector_store %arg7[%c0_13, %c15, %c8_14], %9 {strides = array<i32>} : memref<16x16x12xf32, #tpu.memory_space<vmem>>, vector<16x1x4xf32>,
    %c0_15 = arith.constant 0 : index
    %c0_16 = arith.constant 0 : index
    %c0_17 = arith.constant 0 : index
    %11 = vector.load %arg7[%c0_15, %c0_16, %c0_17] : memref<16x16x12xf32, #tpu.memory_space<vmem>>, vector<16x16x12xf32>
    %12 = vector.shape_cast %11 : vector<16x16x12xf32> to vector<256x12xf32>
    %c0_18 = arith.constant 0 : index
    %c0_19 = arith.constant 0 : index
    %c0_20 = arith.constant 0 : index
    %13 = vector.load %arg2[%c0_18, %c0_19, %c0_20] : memref<3x4x8xf32, #tpu.memory_space<vmem>>, vector<3x4x8xf32>
    %14 = vector.shape_cast %13 : vector<3x4x8xf32> to vector<12x8xf32>
    %cst_21 = arith.constant dense<0.000000e+00> : vector<256x8xf32>
    %15 = tpu.matmul %12, %14, %cst_21 {dimension_numbers = #tpu.dot_dimension_numbers<[1], [0], [0], [1], [0, 0, 1, 1], [], []>} : vector<256x12xf32>, vector<12x8xf32>, vector<256x8xf32> -> vector<256x8xf32>
    %c0_22 = arith.constant 0 : index
    %c0_23 = arith.constant 0 : index
    %16 = vector.load %arg3[%c0_22, %c0_23] : memref<1x8xf32, #tpu.memory_space<vmem>>, vector<1x8xf32>
    %17 = vector.broadcast %16 : vector<1x8xf32> to vector<256x8xf32>
    %18 = arith.addf %15, %17 : vector<256x8xf32>
    %19 = arith.negf %18 : vector<256x8xf32>
    %20 = math.exp %19 : vector<256x8xf32>
    %cst_24 = arith.constant 1.000000e+00 : f32
    %21 = vector.broadcast %cst_24 : f32 to vector<256x8xf32>
    %22 = arith.addf %21, %20 : vector<256x8xf32>
    %23 = arith.divf %21, %22 : vector<256x8xf32>
    %24 = arith.mulf %18, %23 : vector<256x8xf32>
    %25 = vector.shape_cast %24 : vector<256x8xf32> to vector<16x16x8xf32>
    %26 = vector.extract_strided_slice %25 {offsets = [0, 0, 0], sizes = [15, 16, 8], strides = [1, 1, 1]} : vector<16x16x8xf32> to vector<15x16x8xf32>
    %c1_25 = arith.constant 1 : index
    %c0_26 = arith.constant 0 : index
    %c0_27 = arith.constant 0 : index
    %27 = vector.load %arg8[%c1_25, %c0_26, %c0_27] : memref<16x16x24xf32, #tpu.memory_space<vmem>>, vector<15x16x8xf32>
    tpu.vector_store %arg8[%c1_25, %c0_26, %c0_27], %26 {strides = array<i32>} : memref<16x16x24xf32, #tpu.memory_space<vmem>>, vector<15x16x8xf32>,
    %cst_28 = arith.constant 0.000000e+00 : f32
    %28 = vector.broadcast %cst_28 : f32 to vector<1x16x8xf32>
    %c0_29 = arith.constant 0 : index
    %c0_30 = arith.constant 0 : index
    %c0_31 = arith.constant 0 : index
    %29 = vector.load %arg8[%c0_29, %c0_30, %c0_31] : memref<16x16x24xf32, #tpu.memory_space<vmem>>, vector<1x16x8xf32>
    tpu.vector_store %arg8[%c0_29, %c0_30, %c0_31], %28 {strides = array<i32>} : memref<16x16x24xf32, #tpu.memory_space<vmem>>, vector<1x16x8xf32>,
    %c0_32 = arith.constant 0 : index
    %c0_33 = arith.constant 0 : index
    %c8_34 = arith.constant 8 : index
    %30 = vector.load %arg8[%c0_32, %c0_33, %c8_34] : memref<16x16x24xf32, #tpu.memory_space<vmem>>, vector<16x16x8xf32>
    tpu.vector_store %arg8[%c0_32, %c0_33, %c8_34], %25 {strides = array<i32>} : memref<16x16x24xf32, #tpu.memory_space<vmem>>, vector<16x16x8xf32>,
    %31 = vector.extract_strided_slice %25 {offsets = [1, 0, 0], sizes = [15, 16, 8], strides = [1, 1, 1]} : vector<16x16x8xf32> to vector<15x16x8xf32>
    %c0_35 = arith.constant 0 : index
    %c0_36 = arith.constant 0 : index
    %c16 = arith.constant 16 : index
    %32 = vector.load %arg8[%c0_35, %c0_36, %c16] : memref<16x16x24xf32, #tpu.memory_space<vmem>>, vector<15x16x8xf32>
    tpu.vector_store %arg8[%c0_35, %c0_36, %c16], %31 {strides = array<i32>} : memref<16x16x24xf32, #tpu.memory_space<vmem>>, vector<15x16x8xf32>,
    %cst_37 = arith.constant 0.000000e+00 : f32
    %33 = vector.broadcast %cst_37 : f32 to vector<1x16x8xf32>
    %c15_38 = arith.constant 15 : index
    %c0_39 = arith.constant 0 : index
    %c16_40 = arith.constant 16 : index
    %34 = vector.load %arg8[%c15_38, %c0_39, %c16_40] : memref<16x16x24xf32, #tpu.memory_space<vmem>>, vector<1x16x8xf32>
    tpu.vector_store %arg8[%c15_38, %c0_39, %c16_40], %33 {strides = array<i32>} : memref<16x16x24xf32, #tpu.memory_space<vmem>>, vector<1x16x8xf32>,
    %c0_41 = arith.constant 0 : index
    %c0_42 = arith.constant 0 : index
    %c0_43 = arith.constant 0 : index
    %35 = vector.load %arg8[%c0_41, %c0_42, %c0_43] : memref<16x16x24xf32, #tpu.memory_space<vmem>>, vector<16x16x24xf32>
    %36 = vector.shape_cast %35 : vector<16x16x24xf32> to vector<256x24xf32>
    %c0_44 = arith.constant 0 : index
    %c0_45 = arith.constant 0 : index
    %c0_46 = arith.constant 0 : index
    %37 = vector.load %arg4[%c0_44, %c0_45, %c0_46] : memref<3x8x128xf32, #tpu.memory_space<vmem>>, vector<3x8x128xf32>
    %38 = vector.shape_cast %37 : vector<3x8x128xf32> to vector<24x128xf32>
    %cst_47 = arith.constant dense<0.000000e+00> : vector<256x128xf32>
    %39 = tpu.matmul %36, %38, %cst_47 {dimension_numbers = #tpu.dot_dimension_numbers<[1], [0], [0], [1], [0, 0, 1, 1], [], []>} : vector<256x24xf32>, vector<24x128xf32>, vector<256x128xf32> -> vector<256x128xf32>
    %c0_48 = arith.constant 0 : index
    %c0_49 = arith.constant 0 : index
    %40 = vector.load %arg5[%c0_48, %c0_49] : memref<1x128xf32, #tpu.memory_space<vmem>>, vector<1x128xf32>
    %41 = vector.broadcast %40 : vector<1x128xf32> to vector<256x128xf32>
    %42 = arith.addf %39, %41 : vector<256x128xf32>
    %43 = arith.negf %42 : vector<256x128xf32>
    %44 = math.exp %43 : vector<256x128xf32>
    %cst_50 = arith.constant 1.000000e+00 : f32
    %45 = vector.broadcast %cst_50 : f32 to vector<256x128xf32>
    %46 = arith.addf %45, %44 : vector<256x128xf32>
    %47 = arith.divf %45, %46 : vector<256x128xf32>
    %48 = arith.mulf %42, %47 : vector<256x128xf32>
    %49 = vector.shape_cast %48 : vector<256x128xf32> to vector<16x16x128xf32>
    %c0_51 = arith.constant 0 : index
    %c0_52 = arith.constant 0 : index
    %c0_53 = arith.constant 0 : index
    %c0_54 = arith.constant 0 : index
    %50 = vector.load %arg6[%c0_51, %c0_52, %c0_53, %c0_54] : memref<1x16x16x128xf32, #tpu.memory_space<vmem>>, vector<1x16x16x128xf32>
    %51 = vector.shape_cast %50 : vector<1x16x16x128xf32> to vector<16x16x128xf32>
    %52 = vector.shape_cast %49 : vector<16x16x128xf32> to vector<1x16x16x128xf32>
    tpu.vector_store %arg6[%c0_51, %c0_52, %c0_53, %c0_54], %52 {strides = array<i32>} : memref<1x16x16x128xf32, #tpu.memory_space<vmem>>, vector<1x16x16x128xf32>,
    return
  }
  func.func @transform_0(%arg0: i32) -> (i32, i32, i32, i32) {
    %c0_i32 = arith.constant 0 : i32
    %c0_i32_0 = arith.constant 0 : i32
    %c0_i32_1 = arith.constant 0 : i32
    %c0_i32_2 = arith.constant 0 : i32
    return %arg0, %c0_i32, %c0_i32_0, %c0_i32_1 : i32, i32, i32, i32
  }
  func.func @transform_1(%arg0: i32) -> (i32, i32, i32) {
    %c0_i32 = arith.constant 0 : i32
    %c0_i32_0 = arith.constant 0 : i32
    %c0_i32_1 = arith.constant 0 : i32
    %c0_i32_2 = arith.constant 0 : i32
    return %c0_i32, %c0_i32_0, %c0_i32_1 : i32, i32, i32
  }
  func.func @transform_2(%arg0: i32) -> (i32, i32) {
    %c0_i32 = arith.constant 0 : i32
    %c0_i32_0 = arith.constant 0 : i32
    %c0_i32_1 = arith.constant 0 : i32
    return %c0_i32, %c0_i32_0 : i32, i32
  }
  func.func @transform_3(%arg0: i32) -> (i32, i32, i32) {
    %c0_i32 = arith.constant 0 : i32
    %c0_i32_0 = arith.constant 0 : i32
    %c0_i32_1 = arith.constant 0 : i32
    %c0_i32_2 = arith.constant 0 : i32
    return %c0_i32, %c0_i32_0, %c0_i32_1 : i32, i32, i32
  }
  func.func @transform_4(%arg0: i32) -> (i32, i32) {
    %c0_i32 = arith.constant 0 : i32
    %c0_i32_0 = arith.constant 0 : i32
    %c0_i32_1 = arith.constant 0 : i32
    return %c0_i32, %c0_i32_0 : i32, i32
  }
  func.func @transform_5(%arg0: i32) -> (i32, i32, i32, i32) {
    %c0_i32 = arith.constant 0 : i32
    %c0_i32_0 = arith.constant 0 : i32
    %c0_i32_1 = arith.constant 0 : i32
    %c0_i32_2 = arith.constant 0 : i32
    return %arg0, %c0_i32, %c0_i32_0, %c0_i32_1 : i32, i32, i32, i32
  }
}

</mosaic_0001>

<llo_original>
// kernel: tpu_custom_call.1
$region0: #{tpu_custom_call.1}
  #allocation0 [shape = 'u32[]', space=smem, size = 0x4, offset = 0x4, fixed_abs, tag = 'smem constant byte address 0x4 - core index']
  #allocation1 [shape = 'u32[72,128]{1,0:T(1,128)}', space=vmem, size = 0x9000, scoped, tag = 'internal scratch']
  #allocation2 [shape = 'f32[16,16,12]{2,1,0:T(8,128)}', space=vmem, size = 0x20000, scoped, tag = 'scratch operand']
  #allocation3 [shape = 'f32[16,16,24]{2,1,0:T(8,128)}', space=vmem, size = 0x20000, scoped, tag = 'scratch operand']
  %s0 = inlined_call_operand.vmem [shape: f32[2,16,16,4], index: 0, kind: input, shape index: {}]
  %s1 = inlined_call_operand.vmem [shape: f32[3,4,8], index: 1, kind: input, shape index: {}]
  %s2 = inlined_call_operand.vmem [shape: f32[1,8], index: 2, kind: input, shape index: {}]
  %s3 = inlined_call_operand.vmem [shape: f32[3,8,128], index: 3, kind: input, shape index: {}]
  %s4 = inlined_call_operand.vmem [shape: f32[1,128], index: 4, kind: input, shape index: {}]
  %s5 = inlined_call_operand.hbm [shape: f32[2,16,16,128], index: 5, kind: output, shape index: {}]
  %s6 = sld [smem:[#allocation0]]
  $region53: #{tpu_custom_call.1} parent=0
    _
  %s8 = ssub.s32 1, %s6
  %s9 = scalar_select 0, %s8, %s6
  $region1: #{tpu_custom_call.1} parent=0
    #allocation4 [shape = 'u8[262144]{0}', space=vmem, size = 0x40000, scoped, tag = 'output window, operand 0']
    #allocation5 [shape = 's32[2]{0}', space=sflag, size = 0x8, scoped, tag = 'scoped memory for tpu_custom_call.1']
    %10 = vsyncpa [#allocation5], 0
    %s11 = scalar_lea.sflag [#allocation5], 1
    %12 = vsyncpa %s11, 0
    loop: start=0, step=1, limit=4
    $region2: #{tpu_custom_call.1} parent=1 // loop_pre_header
      _
    $region3: #{tpu_custom_call.1} parent=1 // loop_header
      %s14 = sphi 0, %s18
      %p15 = scmp.ge.s32.totalorder %s14, 4
      %s24 = sphi 0, %s26
      %s27 = sphi 0, %s24
      %s28 = sphi 0, %s27
      %s44 = sphi 0, %s28
      %s48 = sphi 0, %s48
      %s50 = sphi 0, %s48
      %s51 = sphi 0, %s50
      %s65 = sphi 0, %s51
      %s69 = sphi 0, %s69
      %s71 = sphi 0, %s69
      %s72 = sphi 0, %s71
      %s86 = sphi 0, %s72
      %s90 = sphi 0, %s90
      %s92 = sphi 0, %s90
      %s93 = sphi 0, %s92
      %s107 = sphi 0, %s93
      %s111 = sphi 0, %s111
      %s113 = sphi 0, %s111
      %s114 = sphi 0, %s113
      %s128 = sphi 0, %s114
      %s134 = sphi 0, %s136
      %s137 = sphi 0, %s134
      %s138 = sphi 0, %s137
      %s154 = sphi 0, %s138
    $region4: #{tpu_custom_call.1} parent=1 // loop_header_branch
      %17 = sbr.rel (%p15) target = $region8
    $region5: #{tpu_custom_call.1} parent=1 // loop_body
      %s19 = ssub.s32 %s14, 1
      %s20 = ssub.s32 %s14, 2
      %s21 = sadd.s32 %s14, 1
      %s22 = ssub.s32 %s14, %s21
      %p23 = scmp.eq.s32.totalorder %s22, 0
      %s25 = sadd.s32 %s24, 1
      %s26 = scalar_select %p23, %s24, %s25
      %p29 = pneg %p23
      %p30 = scmp.eq.s32.totalorder %s14, 1
      %p31 = por %p29, %p30
      %p32 = scmp.ne.s32.totalorder %s24, %s27
      %p33 = scmp.eq.s32.totalorder %s14, 0
      %p34 = por %p32, %p33
      %p35 = scmp.ne.s32.totalorder %s24, %s27
      %p36 = scmp.eq.s32.totalorder %s19, 1
      %p37 = por %p35, %p36
      %p38 = scmp.ne.s32.totalorder %s27, %s28
      %p39 = scmp.eq.s32.totalorder %s19, 0
      %p40 = por %p38, %p39
      %p41 = scmp.ne.s32.totalorder %s27, %s28
      %p42 = scmp.eq.s32.totalorder %s20, 1
      %p43 = por %p41, %p42
      %p45 = scmp.ne.s32.totalorder %s28, %s44
      %p46 = scmp.eq.s32.totalorder %s20, 0
      %p47 = por %p45, %p46
      %s49 = sadd.s32 %s48, 1
      %p52 = scmp.eq.s32.totalorder %s14, 1
      %p53 = scmp.ne.s32.totalorder %s48, %s50
      %p54 = scmp.eq.s32.totalorder %s14, 0
      %p55 = por %p53, %p54
      %p56 = scmp.ne.s32.totalorder %s48, %s50
      %p57 = scmp.eq.s32.totalorder %s19, 1
      %p58 = por %p56, %p57
      %p59 = scmp.ne.s32.totalorder %s50, %s51
      %p60 = scmp.eq.s32.totalorder %s19, 0
      %p61 = por %p59, %p60
      %p62 = scmp.ne.s32.totalorder %s50, %s51
      %p63 = scmp.eq.s32.totalorder %s20, 1
      %p64 = por %p62, %p63
      %p66 = scmp.ne.s32.totalorder %s51, %s65
      %p67 = scmp.eq.s32.totalorder %s20, 0
      %p68 = por %p66, %p67
      %s70 = sadd.s32 %s69, 1
      %p73 = scmp.eq.s32.totalorder %s14, 1
      %p74 = scmp.ne.s32.totalorder %s69, %s71
      %p75 = scmp.eq.s32.totalorder %s14, 0
      %p76 = por %p74, %p75
      %p77 = scmp.ne.s32.totalorder %s69, %s71
      %p78 = scmp.eq.s32.totalorder %s19, 1
      %p79 = por %p77, %p78
      %p80 = scmp.ne.s32.totalorder %s71, %s72
      %p81 = scmp.eq.s32.totalorder %s19, 0
      %p82 = por %p80, %p81
      %p83 = scmp.ne.s32.totalorder %s71, %s72
      %p84 = scmp.eq.s32.totalorder %s20, 1
      %p85 = por %p83, %p84
      %p87 = scmp.ne.s32.totalorder %s72, %s86
      %p88 = scmp.eq.s32.totalorder %s20, 0
      %p89 = por %p87, %p88
      %s91 = sadd.s32 %s90, 1
      %p94 = scmp.eq.s32.totalorder %s14, 1
      %p95 = scmp.ne.s32.totalorder %s90, %s92
      %p96 = scmp.eq.s32.totalorder %s14, 0
      %p97 = por %p95, %p96
      %p98 = scmp.ne.s32.totalorder %s90, %s92
      %p99 = scmp.eq.s32.totalorder %s19, 1
      %p100 = por %p98, %p99
      %p101 = scmp.ne.s32.totalorder %s92, %s93
      %p102 = scmp.eq.s32.totalorder %s19, 0
      %p103 = por %p101, %p102
      %p104 = scmp.ne.s32.totalorder %s92, %s93
      %p105 = scmp.eq.s32.totalorder %s20, 1
      %p106 = por %p104, %p105
      %p108 = scmp.ne.s32.totalorder %s93, %s107
      %p109 = scmp.eq.s32.totalorder %s20, 0
      %p110 = por %p108, %p109
      %s112 = sadd.s32 %s111, 1
      %p115 = scmp.eq.s32.totalorder %s14, 1
      %p116 = scmp.ne.s32.totalorder %s111, %s113
      %p117 = scmp.eq.s32.totalorder %s14, 0
      %p118 = por %p116, %p117
      %p119 = scmp.ne.s32.totalorder %s111, %s113
      %p120 = scmp.eq.s32.totalorder %s19, 1
      %p121 = por %p119, %p120
      %p122 = scmp.ne.s32.totalorder %s113, %s114
      %p123 = scmp.eq.s32.totalorder %s19, 0
      %p124 = por %p122, %p123
      %p125 = scmp.ne.s32.totalorder %s113, %s114
      %p126 = scmp.eq.s32.totalorder %s20, 1
      %p127 = por %p125, %p126
      %p129 = scmp.ne.s32.totalorder %s114, %s128
      %p130 = scmp.eq.s32.totalorder %s20, 0
      %p131 = por %p129, %p130
      %s132 = ssub.s32 %s14, %s21
      %p133 = scmp.eq.s32.totalorder %s132, 0
      %s135 = sadd.s32 %s134, 1
      %s136 = scalar_select %p133, %s134, %s135
      %p139 = pneg %p133
      %p140 = scmp.eq.s32.totalorder %s14, 1
      %p141 = por %p139, %p140
      %p142 = scmp.ne.s32.totalorder %s134, %s137
      %p143 = scmp.eq.s32.totalorder %s14, 0
      %p144 = por %p142, %p143
      %p145 = scmp.ne.s32.totalorder %s134, %s137
      %p146 = scmp.eq.s32.totalorder %s19, 1
      %p147 = por %p145, %p146
      %p148 = scmp.ne.s32.totalorder %s137, %s138
      %p149 = scmp.eq.s32.totalorder %s19, 0
      %p150 = por %p148, %p149
      %p151 = scmp.ne.s32.totalorder %s137, %s138
      %p152 = scmp.eq.s32.totalorder %s20, 1
      %p153 = por %p151, %p152
      %p155 = scmp.ne.s32.totalorder %s138, %s154
      %p156 = scmp.eq.s32.totalorder %s20, 0
      %p157 = por %p155, %p156
      %p158 = scmp.le.s32.totalorder 1, %s14
      %p159 = scmp.lt.s32.totalorder %s14, 3
      %p160 = pnand %p158, %p159
      %p161 = pneg %p160
      // Predicated region
      $region9: #{tpu_custom_call.1} parent=5 // pred_check
        _
      $region10: #{tpu_custom_call.1} parent=5 // pred_check_branch
        %163 = sbr.rel (%p160) target = $region12
      $region11: #{tpu_custom_call.1} parent=5 // pred_region
        %s164 = ssub.s32 %s14, 1
        // Predicated region
        $region13: #{tpu_custom_call.1} parent=11 // pred_check
          %p165 = pneg %p61
        $region14: #{tpu_custom_call.1} parent=11 // pred_check_branch
          %167 = sbr.rel (%p165) target = $region16
        $region15: #{tpu_custom_call.1} parent=11 // pred_region
          _
        $region16: #{tpu_custom_call.1} parent=11 // pred_fallthru
          _
        // Predicated region
        $region17: #{tpu_custom_call.1} parent=11 // pred_check
          %p168 = pneg %p82
        $region18: #{tpu_custom_call.1} parent=11 // pred_check_branch
          %170 = sbr.rel (%p168) target = $region20
        $region19: #{tpu_custom_call.1} parent=11 // pred_region
          _
        $region20: #{tpu_custom_call.1} parent=11 // pred_fallthru
          _
        // Predicated region
        $region21: #{tpu_custom_call.1} parent=11 // pred_check
          %p171 = pneg %p103
        $region22: #{tpu_custom_call.1} parent=11 // pred_check_branch
          %173 = sbr.rel (%p171) target = $region24
        $region23: #{tpu_custom_call.1} parent=11 // pred_region
          _
        $region24: #{tpu_custom_call.1} parent=11 // pred_fallthru
          _
        // Predicated region
        $region25: #{tpu_custom_call.1} parent=11 // pred_check
          %p174 = pneg %p124
        $region26: #{tpu_custom_call.1} parent=11 // pred_check_branch
          %176 = sbr.rel (%p174) target = $region28
        $region27: #{tpu_custom_call.1} parent=11 // pred_region
          _
        $region28: #{tpu_custom_call.1} parent=11 // pred_fallthru
          _
      $region12: #{tpu_custom_call.1} parent=5 // pred_fallthru
        _
      %p177 = scmp.lt.s32.totalorder %s14, 2
      // Predicated region
      $region29: #{tpu_custom_call.1} parent=5 // pred_check
        %p178 = pneg %p177
      $region30: #{tpu_custom_call.1} parent=5 // pred_check_branch
        %180 = sbr.rel (%p178) target = $region32
      $region31: #{tpu_custom_call.1} parent=5 // pred_region
        // Predicated region
        $region33: #{tpu_custom_call.1} parent=31 // pred_check
          %p181 = pneg %p34
        $region34: #{tpu_custom_call.1} parent=31 // pred_check_branch
          %183 = sbr.rel (%p181) target = $region36
        $region35: #{tpu_custom_call.1} parent=31 // pred_region
          %p184 = scmp.lt.s32.totalorder %s14, 1
          %s185 = scalar_select %p184, %s14, 1
          %s186 = smul.addr %s185, 32
          %s187 = smul.addr %s186, 8
          %s188 = scalar_lea.vmem %s0, %s187
        $region36: #{tpu_custom_call.1} parent=31 // pred_fallthru
          _
      $region32: #{tpu_custom_call.1} parent=5 // pred_fallthru
        _
      %p189 = scmp.le.s32.totalorder 1, %s14
      %p190 = scmp.lt.s32.totalorder %s14, 3
      %p191 = pnand %p189, %p190
      %p192 = pneg %p191
      // Predicated region
      $region37: #{tpu_custom_call.1} parent=5 // pred_check
        _
      $region38: #{tpu_custom_call.1} parent=5 // pred_check_branch
        %194 = sbr.rel (%p191) target = $region40
      $region39: #{tpu_custom_call.1} parent=5 // pred_region
        %s195 = ssub.s32 %s14, 1
        %p196 = scmp.lt.s32.totalorder %s19, 1
        %s197 = scalar_select %p196, %s19, 1
        %s198 = smul.addr %s197, 32
        %s199 = smul.addr %s198, 8
        %s200 = scalar_lea.vmem %s0, %s199
        %p201 = pneg %p40
        %p202 = pneg %p37
        %p203 = pneg %p61
        %p204 = pneg %p58
        %p205 = pneg %p82
        %p206 = pneg %p79
        %p207 = pneg %p103
        %p208 = pneg %p100
        %p209 = pneg %p124
        %p210 = pneg %p121
        %p211 = pneg %p150
        %p212 = pneg %p147
        %s213 = sand.u32 %s137, 1
        %s214 = scalar_lea.sflag [#allocation5], %s213
        %s215 = sand.u32 %s137, 1
        %s216 = smul.addr %s215, 256
        %s217 = scalar_lea.vmem [#allocation4], %s216
        %p218 = scmp.lt.s32.totalorder %s19, 1
        %s219 = scalar_select %p218, %s19, 1
        %s220 = smul.addr %s219, 32
        %s221 = smul.addr %s220, 8
        %s222 = scalar_lea.vmem %s0, %s221
        %v223 = vld [vmem:[%s222] sm:$0xff]
        %v224 = vld [vmem:[%s222 + $0x8] sm:$0xff]
        %v225 = vld [vmem:[%s222 + $0x10] sm:$0xff]
        %v226 = vld [vmem:[%s222 + $0x18] sm:$0xff]
        %v227 = vld [vmem:[%s222 + $0x20] sm:$0xff]
        %v228 = vld [vmem:[%s222 + $0x28] sm:$0xff]
        %v229 = vld [vmem:[%s222 + $0x30] sm:$0xff]
        %v230 = vld [vmem:[%s222 + $0x38] sm:$0xff]
        %v231 = vld [vmem:[%s222 + $0x40] sm:$0xff]
        %v232 = vld [vmem:[%s222 + $0x48] sm:$0xff]
        %v233 = vld [vmem:[%s222 + $0x50] sm:$0xff]
        %v234 = vld [vmem:[%s222 + $0x58] sm:$0xff]
        %v235 = vld [vmem:[%s222 + $0x60] sm:$0xff]
        %v236 = vld [vmem:[%s222 + $0x68] sm:$0xff]
        %v237 = vld [vmem:[%s222 + $0x70] sm:$0xff]
        %v238 = vld [vmem:[%s222 + $0x78] sm:$0xff]
        %v239 = vld [vmem:[%s222 + $0x80] sm:$0xff]
        %v240 = vld [vmem:[%s222 + $0x88] sm:$0xff]
        %v241 = vld [vmem:[%s222 + $0x90] sm:$0xff]
        %v242 = vld [vmem:[%s222 + $0x98] sm:$0xff]
        %v243 = vld [vmem:[%s222 + $0xa0] sm:$0xff]
        %v244 = vld [vmem:[%s222 + $0xa8] sm:$0xff]
        %v245 = vld [vmem:[%s222 + $0xb0] sm:$0xff]
        %v246 = vld [vmem:[%s222 + $0xb8] sm:$0xff]
        %v247 = vld [vmem:[%s222 + $0xc0] sm:$0xff]
        %v248 = vld [vmem:[%s222 + $0xc8] sm:$0xff]
        %v249 = vld [vmem:[%s222 + $0xd0] sm:$0xff]
        %v250 = vld [vmem:[%s222 + $0xd8] sm:$0xff]
        %v251 = vld [vmem:[%s222 + $0xe0] sm:$0xff]
        %v252 = vld [vmem:[%s222 + $0xe8] sm:$0xff]
        %v253 = vld [vmem:[%s222 + $0xf0] sm:$0xff]
        %v254 = vld [vmem:[%s222 + $0xf8] sm:$0xff]
        %vm255 = vcmask 31744
        %256 = vst.msk [vmem:[#allocation2 + $0x1] sm:$0xff] %vm255, %v223
        %vm257 = vcmask 30720
        %258 = vst.msk [vmem:[#allocation2 + $0x9] sm:$0x7f] %vm257, %v224
        %259 = vst.msk [vmem:[#allocation2 + $0x11] sm:$0xff] %vm255, %v225
        %260 = vst.msk [vmem:[#allocation2 + $0x19] sm:$0x7f] %vm257, %v226
        %261 = vst.msk [vmem:[#allocation2 + $0x21] sm:$0xff] %vm255, %v227
        %262 = vst.msk [vmem:[#allocation2 + $0x29] sm:$0x7f] %vm257, %v228
        %263 = vst.msk [vmem:[#allocation2 + $0x31] sm:$0xff] %vm255, %v229
        %264 = vst.msk [vmem:[#allocation2 + $0x39] sm:$0x7f] %vm257, %v230
        %265 = vst.msk [vmem:[#allocation2 + $0x41] sm:$0xff] %vm255, %v231
        %266 = vst.msk [vmem:[#allocation2 + $0x49] sm:$0x7f] %vm257, %v232
        %267 = vst.msk [vmem:[#allocation2 + $0x51] sm:$0xff] %vm255, %v233
        %268 = vst.msk [vmem:[#allocation2 + $0x59] sm:$0x7f] %vm257, %v234
        %269 = vst.msk [vmem:[#allocation2 + $0x61] sm:$0xff] %vm255, %v235
        %270 = vst.msk [vmem:[#allocation2 + $0x69] sm:$0x7f] %vm257, %v236
        %271 = vst.msk [vmem:[#allocation2 + $0x71] sm:$0xff] %vm255, %v237
        %272 = vst.msk [vmem:[#allocation2 + $0x79] sm:$0x7f] %vm257, %v238
        %273 = vst.msk [vmem:[#allocation2 + $0x81] sm:$0xff] %vm255, %v239
        %274 = vst.msk [vmem:[#allocation2 + $0x89] sm:$0x7f] %vm257, %v240
        %275 = vst.msk [vmem:[#allocation2 + $0x91] sm:$0xff] %vm255, %v241
        %276 = vst.msk [vmem:[#allocation2 + $0x99] sm:$0x7f] %vm257, %v242
        %277 = vst.msk [vmem:[#allocation2 + $0xa1] sm:$0xff] %vm255, %v243
        %278 = vst.msk [vmem:[#allocation2 + $0xa9] sm:$0x7f] %vm257, %v244
        %279 = vst.msk [vmem:[#allocation2 + $0xb1] sm:$0xff] %vm255, %v245
        %280 = vst.msk [vmem:[#allocation2 + $0xb9] sm:$0x7f] %vm257, %v246
        %281 = vst.msk [vmem:[#allocation2 + $0xc1] sm:$0xff] %vm255, %v247
        %282 = vst.msk [vmem:[#allocation2 + $0xc9] sm:$0x7f] %vm257, %v248
        %283 = vst.msk [vmem:[#allocation2 + $0xd1] sm:$0xff] %vm255, %v249
        %284 = vst.msk [vmem:[#allocation2 + $0xd9] sm:$0x7f] %vm257, %v250
        %285 = vst.msk [vmem:[#allocation2 + $0xe1] sm:$0xff] %vm255, %v251
        %286 = vst.msk [vmem:[#allocation2 + $0xe9] sm:$0x7f] %vm257, %v252
        %287 = vst.msk [vmem:[#allocation2 + $0xf1] sm:$0xff] %vm255, %v253
        %288 = vst.msk [vmem:[#allocation2 + $0xf9] sm:$0x7f] %vm257, %v254
        %vm289 = vcmask 24576
        %290 = vst.msk [vmem:[#allocation2] sm:$0x1] %vm289, 0.0
        %291 = vst.msk [vmem:[#allocation2 + $0x10] sm:$0x1] %vm289, 0.0
        %292 = vst.msk [vmem:[#allocation2 + $0x20] sm:$0x1] %vm289, 0.0
        %293 = vst.msk [vmem:[#allocation2 + $0x30] sm:$0x1] %vm289, 0.0
        %294 = vst.msk [vmem:[#allocation2 + $0x40] sm:$0x1] %vm289, 0.0
        %295 = vst.msk [vmem:[#allocation2 + $0x50] sm:$0x1] %vm289, 0.0
        %296 = vst.msk [vmem:[#allocation2 + $0x60] sm:$0x1] %vm289, 0.0
        %297 = vst.msk [vmem:[#allocation2 + $0x70] sm:$0x1] %vm289, 0.0
        %298 = vst.msk [vmem:[#allocation2 + $0x80] sm:$0x1] %vm289, 0.0
        %299 = vst.msk [vmem:[#allocation2 + $0x90] sm:$0x1] %vm289, 0.0
        %300 = vst.msk [vmem:[#allocation2 + $0xa0] sm:$0x1] %vm289, 0.0
        %301 = vst.msk [vmem:[#allocation2 + $0xb0] sm:$0x1] %vm289, 0.0
        %302 = vst.msk [vmem:[#allocation2 + $0xc0] sm:$0x1] %vm289, 0.0
        %303 = vst.msk [vmem:[#allocation2 + $0xd0] sm:$0x1] %vm289, 0.0
        %304 = vst.msk [vmem:[#allocation2 + $0xe0] sm:$0x1] %vm289, 0.0
        %305 = vst.msk [vmem:[#allocation2 + $0xf0] sm:$0x1] %vm289, 0.0
        %338 = vrot.lane.b32.xlu0 %v223, 4
        %v339 = vpop.permute.xlu0 %338
        %340 = vrot.lane.b32.xlu0 %v224, 4
        %v341 = vpop.permute.xlu0 %340
        %342 = vrot.lane.b32.xlu0 %v225, 4
        %v343 = vpop.permute.xlu0 %342
        %344 = vrot.lane.b32.xlu0 %v226, 4
        %v345 = vpop.permute.xlu0 %344
        %346 = vrot.lane.b32.xlu0 %v227, 4
        %v347 = vpop.permute.xlu0 %346
        %348 = vrot.lane.b32.xlu0 %v228, 4
        %v349 = vpop.permute.xlu0 %348
        %350 = vrot.lane.b32.xlu0 %v229, 4
        %v351 = vpop.permute.xlu0 %350
        %352 = vrot.lane.b32.xlu0 %v230, 4
        %v353 = vpop.permute.xlu0 %352
        %354 = vrot.lane.b32.xlu0 %v231, 4
        %v355 = vpop.permute.xlu0 %354
        %356 = vrot.lane.b32.xlu0 %v232, 4
        %v357 = vpop.permute.xlu0 %356
        %358 = vrot.lane.b32.xlu0 %v233, 4
        %v359 = vpop.permute.xlu0 %358
        %360 = vrot.lane.b32.xlu0 %v234, 4
        %v361 = vpop.permute.xlu0 %360
        %362 = vrot.lane.b32.xlu0 %v235, 4
        %v363 = vpop.permute.xlu0 %362
        %364 = vrot.lane.b32.xlu0 %v236, 4
        %v365 = vpop.permute.xlu0 %364
        %366 = vrot.lane.b32.xlu0 %v237, 4
        %v367 = vpop.permute.xlu0 %366
        %368 = vrot.lane.b32.xlu0 %v238, 4
        %v369 = vpop.permute.xlu0 %368
        %370 = vrot.lane.b32.xlu0 %v239, 4
        %v371 = vpop.permute.xlu0 %370
        %372 = vrot.lane.b32.xlu0 %v240, 4
        %v373 = vpop.permute.xlu0 %372
        %374 = vrot.lane.b32.xlu0 %v241, 4
        %v375 = vpop.permute.xlu0 %374
        %376 = vrot.lane.b32.xlu0 %v242, 4
        %v377 = vpop.permute.xlu0 %376
        %378 = vrot.lane.b32.xlu0 %v243, 4
        %v379 = vpop.permute.xlu0 %378
        %380 = vrot.lane.b32.xlu0 %v244, 4
        %v381 = vpop.permute.xlu0 %380
        %382 = vrot.lane.b32.xlu0 %v245, 4
        %v383 = vpop.permute.xlu0 %382
        %384 = vrot.lane.b32.xlu0 %v246, 4
        %v385 = vpop.permute.xlu0 %384
        %386 = vrot.lane.b32.xlu0 %v247, 4
        %v387 = vpop.permute.xlu0 %386
        %388 = vrot.lane.b32.xlu0 %v248, 4
        %v389 = vpop.permute.xlu0 %388
        %390 = vrot.lane.b32.xlu0 %v249, 4
        %v391 = vpop.permute.xlu0 %390
        %392 = vrot.lane.b32.xlu0 %v250, 4
        %v393 = vpop.permute.xlu0 %392
        %394 = vrot.lane.b32.xlu0 %v251, 4
        %v395 = vpop.permute.xlu0 %394
        %396 = vrot.lane.b32.xlu0 %v252, 4
        %v397 = vpop.permute.xlu0 %396
        %398 = vrot.lane.b32.xlu0 %v253, 4
        %v399 = vpop.permute.xlu0 %398
        %400 = vrot.lane.b32.xlu0 %v254, 4
        %v401 = vpop.permute.xlu0 %400
        %vm434 = vcmask 64544
        %435 = vst.msk [vmem:[#allocation2] sm:$0xff] %vm434, %v339
        %436 = vst.msk [vmem:[#allocation2 + $0x8] sm:$0xff] %vm434, %v341
        %437 = vst.msk [vmem:[#allocation2 + $0x10] sm:$0xff] %vm434, %v343
        %438 = vst.msk [vmem:[#allocation2 + $0x18] sm:$0xff] %vm434, %v345
        %439 = vst.msk [vmem:[#allocation2 + $0x20] sm:$0xff] %vm434, %v347
        %440 = vst.msk [vmem:[#allocation2 + $0x28] sm:$0xff] %vm434, %v349
        %441 = vst.msk [vmem:[#allocation2 + $0x30] sm:$0xff] %vm434, %v351
        %442 = vst.msk [vmem:[#allocation2 + $0x38] sm:$0xff] %vm434, %v353
        %443 = vst.msk [vmem:[#allocation2 + $0x40] sm:$0xff] %vm434, %v355
        %444 = vst.msk [vmem:[#allocation2 + $0x48] sm:$0xff] %vm434, %v357
        %445 = vst.msk [vmem:[#allocation2 + $0x50] sm:$0xff] %vm434, %v359
        %446 = vst.msk [vmem:[#allocation2 + $0x58] sm:$0xff] %vm434, %v361
        %447 = vst.msk [vmem:[#allocation2 + $0x60] sm:$0xff] %vm434, %v363
        %448 = vst.msk [vmem:[#allocation2 + $0x68] sm:$0xff] %vm434, %v365
        %449 = vst.msk [vmem:[#allocation2 + $0x70] sm:$0xff] %vm434, %v367
        %450 = vst.msk [vmem:[#allocation2 + $0x78] sm:$0xff] %vm434, %v369
        %451 = vst.msk [vmem:[#allocation2 + $0x80] sm:$0xff] %vm434, %v371
        %452 = vst.msk [vmem:[#allocation2 + $0x88] sm:$0xff] %vm434, %v373
        %453 = vst.msk [vmem:[#allocation2 + $0x90] sm:$0xff] %vm434, %v375
        %454 = vst.msk [vmem:[#allocation2 + $0x98] sm:$0xff] %vm434, %v377
        %455 = vst.msk [vmem:[#allocation2 + $0xa0] sm:$0xff] %vm434, %v379
        %456 = vst.msk [vmem:[#allocation2 + $0xa8] sm:$0xff] %vm434, %v381
        %457 = vst.msk [vmem:[#allocation2 + $0xb0] sm:$0xff] %vm434, %v383
        %458 = vst.msk [vmem:[#allocation2 + $0xb8] sm:$0xff] %vm434, %v385
        %459 = vst.msk [vmem:[#allocation2 + $0xc0] sm:$0xff] %vm434, %v387
        %460 = vst.msk [vmem:[#allocation2 + $0xc8] sm:$0xff] %vm434, %v389
        %461 = vst.msk [vmem:[#allocation2 + $0xd0] sm:$0xff] %vm434, %v391
        %462 = vst.msk [vmem:[#allocation2 + $0xd8] sm:$0xff] %vm434, %v393
        %463 = vst.msk [vmem:[#allocation2 + $0xe0] sm:$0xff] %vm434, %v395
        %464 = vst.msk [vmem:[#allocation2 + $0xe8] sm:$0xff] %vm434, %v397
        %465 = vst.msk [vmem:[#allocation2 + $0xf0] sm:$0xff] %vm434, %v399
        %466 = vst.msk [vmem:[#allocation2 + $0xf8] sm:$0xff] %vm434, %v401
        %467 = vrot.lane.b32.xlu0 %v223, 8
        %v468 = vpop.permute.xlu0 %467
        %469 = vrot.lane.b32.xlu0 %v224, 8
        %v470 = vpop.permute.xlu0 %469
        %471 = vrot.lane.b32.xlu0 %v225, 8
        %v472 = vpop.permute.xlu0 %471
        %473 = vrot.lane.b32.xlu0 %v226, 8
        %v474 = vpop.permute.xlu0 %473
        %475 = vrot.lane.b32.xlu0 %v227, 8
        %v476 = vpop.permute.xlu0 %475
        %477 = vrot.lane.b32.xlu0 %v228, 8
        %v478 = vpop.permute.xlu0 %477
        %479 = vrot.lane.b32.xlu0 %v229, 8
        %v480 = vpop.permute.xlu0 %479
        %481 = vrot.lane.b32.xlu0 %v230, 8
        %v482 = vpop.permute.xlu0 %481
        %483 = vrot.lane.b32.xlu0 %v231, 8
        %v484 = vpop.permute.xlu0 %483
        %485 = vrot.lane.b32.xlu0 %v232, 8
        %v486 = vpop.permute.xlu0 %485
        %487 = vrot.lane.b32.xlu0 %v233, 8
        %v488 = vpop.permute.xlu0 %487
        %489 = vrot.lane.b32.xlu0 %v234, 8
        %v490 = vpop.permute.xlu0 %489
        %491 = vrot.lane.b32.xlu0 %v235, 8
        %v492 = vpop.permute.xlu0 %491
        %493 = vrot.lane.b32.xlu0 %v236, 8
        %v494 = vpop.permute.xlu0 %493
        %495 = vrot.lane.b32.xlu0 %v237, 8
        %v496 = vpop.permute.xlu0 %495
        %497 = vrot.lane.b32.xlu0 %v238, 8
        %v498 = vpop.permute.xlu0 %497
        %499 = vrot.lane.b32.xlu0 %v239, 8
        %v500 = vpop.permute.xlu0 %499
        %501 = vrot.lane.b32.xlu0 %v240, 8
        %v502 = vpop.permute.xlu0 %501
        %503 = vrot.lane.b32.xlu0 %v241, 8
        %v504 = vpop.permute.xlu0 %503
        %505 = vrot.lane.b32.xlu0 %v242, 8
        %v506 = vpop.permute.xlu0 %505
        %507 = vrot.lane.b32.xlu0 %v243, 8
        %v508 = vpop.permute.xlu0 %507
        %509 = vrot.lane.b32.xlu0 %v244, 8
        %v510 = vpop.permute.xlu0 %509
        %511 = vrot.lane.b32.xlu0 %v245, 8
        %v512 = vpop.permute.xlu0 %511
        %513 = vrot.lane.b32.xlu0 %v246, 8
        %v514 = vpop.permute.xlu0 %513
        %515 = vrot.lane.b32.xlu0 %v247, 8
        %v516 = vpop.permute.xlu0 %515
        %517 = vrot.lane.b32.xlu0 %v248, 8
        %v518 = vpop.permute.xlu0 %517
        %519 = vrot.lane.b32.xlu0 %v249, 8
        %v520 = vpop.permute.xlu0 %519
        %521 = vrot.lane.b32.xlu0 %v250, 8
        %v522 = vpop.permute.xlu0 %521
        %523 = vrot.lane.b32.xlu0 %v251, 8
        %v524 = vpop.permute.xlu0 %523
        %525 = vrot.lane.b32.xlu0 %v252, 8
        %v526 = vpop.permute.xlu0 %525
        %527 = vrot.lane.b32.xlu0 %v253, 8
        %v528 = vpop.permute.xlu0 %527
        %529 = vrot.lane.b32.xlu0 %v254, 8
        %v530 = vpop.permute.xlu0 %529
        %vm563 = vcmask 97345
        %564 = vst.msk [vmem:[#allocation2 - $0x1] sm:$0xfe] %vm563, %v468
        %vm565 = vcmask 97344
        %566 = vst.msk [vmem:[#allocation2 + $0x7] sm:$0xff] %vm565, %v470
        %567 = vst.msk [vmem:[#allocation2 + $0xf] sm:$0xfe] %vm563, %v472
        %568 = vst.msk [vmem:[#allocation2 + $0x17] sm:$0xff] %vm565, %v474
        %569 = vst.msk [vmem:[#allocation2 + $0x1f] sm:$0xfe] %vm563, %v476
        %570 = vst.msk [vmem:[#allocation2 + $0x27] sm:$0xff] %vm565, %v478
        %571 = vst.msk [vmem:[#allocation2 + $0x2f] sm:$0xfe] %vm563, %v480
        %572 = vst.msk [vmem:[#allocation2 + $0x37] sm:$0xff] %vm565, %v482
        %573 = vst.msk [vmem:[#allocation2 + $0x3f] sm:$0xfe] %vm563, %v484
        %574 = vst.msk [vmem:[#allocation2 + $0x47] sm:$0xff] %vm565, %v486
        %575 = vst.msk [vmem:[#allocation2 + $0x4f] sm:$0xfe] %vm563, %v488
        %576 = vst.msk [vmem:[#allocation2 + $0x57] sm:$0xff] %vm565, %v490
        %577 = vst.msk [vmem:[#allocation2 + $0x5f] sm:$0xfe] %vm563, %v492
        %578 = vst.msk [vmem:[#allocation2 + $0x67] sm:$0xff] %vm565, %v494
        %579 = vst.msk [vmem:[#allocation2 + $0x6f] sm:$0xfe] %vm563, %v496
        %580 = vst.msk [vmem:[#allocation2 + $0x77] sm:$0xff] %vm565, %v498
        %581 = vst.msk [vmem:[#allocation2 + $0x7f] sm:$0xfe] %vm563, %v500
        %582 = vst.msk [vmem:[#allocation2 + $0x87] sm:$0xff] %vm565, %v502
        %583 = vst.msk [vmem:[#allocation2 + $0x8f] sm:$0xfe] %vm563, %v504
        %584 = vst.msk [vmem:[#allocation2 + $0x97] sm:$0xff] %vm565, %v506
        %585 = vst.msk [vmem:[#allocation2 + $0x9f] sm:$0xfe] %vm563, %v508
        %586 = vst.msk [vmem:[#allocation2 + $0xa7] sm:$0xff] %vm565, %v510
        %587 = vst.msk [vmem:[#allocation2 + $0xaf] sm:$0xfe] %vm563, %v512
        %588 = vst.msk [vmem:[#allocation2 + $0xb7] sm:$0xff] %vm565, %v514
        %589 = vst.msk [vmem:[#allocation2 + $0xbf] sm:$0xfe] %vm563, %v516
        %590 = vst.msk [vmem:[#allocation2 + $0xc7] sm:$0xff] %vm565, %v518
        %591 = vst.msk [vmem:[#allocation2 + $0xcf] sm:$0xfe] %vm563, %v520
        %592 = vst.msk [vmem:[#allocation2 + $0xd7] sm:$0xff] %vm565, %v522
        %593 = vst.msk [vmem:[#allocation2 + $0xdf] sm:$0xfe] %vm563, %v524
        %594 = vst.msk [vmem:[#allocation2 + $0xe7] sm:$0xff] %vm565, %v526
        %595 = vst.msk [vmem:[#allocation2 + $0xef] sm:$0xfe] %vm563, %v528
        %596 = vst.msk [vmem:[#allocation2 + $0xf7] sm:$0xff] %vm565, %v530
        %vm597 = vcmask 90176
        %598 = vst.msk [vmem:[#allocation2 + $0xf] sm:$0x1] %vm597, 0.0
        %599 = vst.msk [vmem:[#allocation2 + $0x1f] sm:$0x1] %vm597, 0.0
        %600 = vst.msk [vmem:[#allocation2 + $0x2f] sm:$0x1] %vm597, 0.0
        %601 = vst.msk [vmem:[#allocation2 + $0x3f] sm:$0x1] %vm597, 0.0
        %602 = vst.msk [vmem:[#allocation2 + $0x4f] sm:$0x1] %vm597, 0.0
        %603 = vst.msk [vmem:[#allocation2 + $0x5f] sm:$0x1] %vm597, 0.0
        %604 = vst.msk [vmem:[#allocation2 + $0x6f] sm:$0x1] %vm597, 0.0
        %605 = vst.msk [vmem:[#allocation2 + $0x7f] sm:$0x1] %vm597, 0.0
        %606 = vst.msk [vmem:[#allocation2 + $0x8f] sm:$0x1] %vm597, 0.0
        %607 = vst.msk [vmem:[#allocation2 + $0x9f] sm:$0x1] %vm597, 0.0
        %608 = vst.msk [vmem:[#allocation2 + $0xaf] sm:$0x1] %vm597, 0.0
        %609 = vst.msk [vmem:[#allocation2 + $0xbf] sm:$0x1] %vm597, 0.0
        %610 = vst.msk [vmem:[#allocation2 + $0xcf] sm:$0x1] %vm597, 0.0
        %611 = vst.msk [vmem:[#allocation2 + $0xdf] sm:$0x1] %vm597, 0.0
        %612 = vst.msk [vmem:[#allocation2 + $0xef] sm:$0x1] %vm597, 0.0
        %613 = vst.msk [vmem:[#allocation2 + $0xff] sm:$0x1] %vm597, 0.0
        %v614 = vld [vmem:[#allocation2] sm:$0xff]
        %v615 = vld [vmem:[#allocation2 + $0x8] sm:$0xff]
        %v616 = vld [vmem:[#allocation2 + $0x10] sm:$0xff]
        %v617 = vld [vmem:[#allocation2 + $0x18] sm:$0xff]
        %v618 = vld [vmem:[#allocation2 + $0x20] sm:$0xff]
        %v619 = vld [vmem:[#allocation2 + $0x28] sm:$0xff]
        %v620 = vld [vmem:[#allocation2 + $0x30] sm:$0xff]
        %v621 = vld [vmem:[#allocation2 + $0x38] sm:$0xff]
        %v622 = vld [vmem:[#allocation2 + $0x40] sm:$0xff]
        %v623 = vld [vmem:[#allocation2 + $0x48] sm:$0xff]
        %v624 = vld [vmem:[#allocation2 + $0x50] sm:$0xff]
        %v625 = vld [vmem:[#allocation2 + $0x58] sm:$0xff]
        %v626 = vld [vmem:[#allocation2 + $0x60] sm:$0xff]
        %v627 = vld [vmem:[#allocation2 + $0x68] sm:$0xff]
        %v628 = vld [vmem:[#allocation2 + $0x70] sm:$0xff]
        %v629 = vld [vmem:[#allocation2 + $0x78] sm:$0xff]
        %v630 = vld [vmem:[#allocation2 + $0x80] sm:$0xff]
        %v631 = vld [vmem:[#allocation2 + $0x88] sm:$0xff]
        %v632 = vld [vmem:[#allocation2 + $0x90] sm:$0xff]
        %v633 = vld [vmem:[#allocation2 + $0x98] sm:$0xff]
        %v634 = vld [vmem:[#allocation2 + $0xa0] sm:$0xff]
        %v635 = vld [vmem:[#allocation2 + $0xa8] sm:$0xff]
        %v636 = vld [vmem:[#allocation2 + $0xb0] sm:$0xff]
        %v637 = vld [vmem:[#allocation2 + $0xb8] sm:$0xff]
        %v638 = vld [vmem:[#allocation2 + $0xc0] sm:$0xff]
        %v639 = vld [vmem:[#allocation2 + $0xc8] sm:$0xff]
        %v640 = vld [vmem:[#allocation2 + $0xd0] sm:$0xff]
        %v641 = vld [vmem:[#allocation2 + $0xd8] sm:$0xff]
        %v642 = vld [vmem:[#allocation2 + $0xe0] sm:$0xff]
        %v643 = vld [vmem:[#allocation2 + $0xe8] sm:$0xff]
        %v644 = vld [vmem:[#allocation2 + $0xf0] sm:$0xff]
        %v645 = vld [vmem:[#allocation2 + $0xf8] sm:$0xff]
        %v646 = vld [vmem:[%s1] sm:$0xf]
        %v647 = vld [vmem:[%s1 + $0x4] sm:$0xf]
        %v648 = vld [vmem:[%s1 + $0x8] sm:$0xf]
        %v649 = vld [vmem:[%s2] sm:$0x1]
        %v651 = vperm.slane %v649, 0
        %656 = vst [vmem:[#allocation1] ss:$2 sm:$0xff] %v646
        %s657 = scalar_lea.vmem [#allocation1], 1
        %658 = vst [vmem:[%s657] ss:$2 sm:$0xff] %v647
        %s659 = scalar_lea.vmem [#allocation1], 16
        %660 = vst [vmem:[%s659] ss:$2 sm:$0xff] %v648
        %v661 = vld.sshfl [vmem:[#allocation1] sm:$0xff pattern:$0x75316420]
        %v662 = vld.sshfl [vmem:[#allocation1 + $0x10] sm:$0xff pattern:$0x75316420]
        %vm664 = vcmask 97280
        %v666 = vsel %vm664, %v614, 0
        %v669 = vsel %vm664, %v615, 0
        %v672 = vsel %vm664, %v616, 0
        %v675 = vsel %vm664, %v617, 0
        %v678 = vsel %vm664, %v618, 0
        %v681 = vsel %vm664, %v619, 0
        %v684 = vsel %vm664, %v620, 0
        %v687 = vsel %vm664, %v621, 0
        %v690 = vsel %vm664, %v622, 0
        %v693 = vsel %vm664, %v623, 0
        %v696 = vsel %vm664, %v624, 0
        %v699 = vsel %vm664, %v625, 0
        %v702 = vsel %vm664, %v626, 0
        %v705 = vsel %vm664, %v627, 0
        %v708 = vsel %vm664, %v628, 0
        %v711 = vsel %vm664, %v629, 0
        %v714 = vsel %vm664, %v630, 0
        %v717 = vsel %vm664, %v631, 0
        %v720 = vsel %vm664, %v632, 0
        %v723 = vsel %vm664, %v633, 0
        %v726 = vsel %vm664, %v634, 0
        %v729 = vsel %vm664, %v635, 0
        %v732 = vsel %vm664, %v636, 0
        %v735 = vsel %vm664, %v637, 0
        %v738 = vsel %vm664, %v638, 0
        %v741 = vsel %vm664, %v639, 0
        %v744 = vsel %vm664, %v640, 0
        %v747 = vsel %vm664, %v641, 0
        %v750 = vsel %vm664, %v642, 0
        %v753 = vsel %vm664, %v643, 0
        %v756 = vsel %vm664, %v644, 0
        %v759 = vsel %vm664, %v645, 0
        %vm761 = vcmask 1043456
        %v762 = vsel %vm761, %v662, 0
        %764 = vmatpush.msra.mxu0 0.0
        %765 = vmatpush.msra.mxu0 0.0
        %766 = vmatpush.msra.mxu0 0.0
        %767 = vmatpush.msra.mxu0 0.0
        %768 = vmatpush.msra.mxu0 0.0
        %769 = vmatpush.msra.mxu0 0.0
        %770 = vmatpush.msra.mxu0 0.0
        %771 = vmatpush.msra.mxu0 0.0
        %772 = vmatpush.msra.mxu0 0.0
        %773 = vmatpush.msra.mxu0 0.0
        %774 = vmatpush.msra.mxu0 0.0
        %775 = vmatpush.msra.mxu0 0.0
        %776 = vmatpush.msra.mxu0 0.0
        %777 = vmatpush.msra.mxu0 0.0
        %778 = vmatpush.msra.mxu0 %v762
        %779 = vmatpush.msra.mxu0 %v661
        %780 = vmatmul.f32.gmra.mxu0 %v666
        %v781 = vpop.f32.mrf.mxu0
        %v782 = vadd.f32 %v651, %v781
        %783 = vmatmul.f32.gmra.mxu0 %v669
        %v784 = vpop.f32.mrf.mxu0
        %v785 = vadd.f32 %v651, %v784
        %786 = vmatmul.f32.gmra.mxu0 %v672
        %v787 = vpop.f32.mrf.mxu0
        %v788 = vadd.f32 %v651, %v787
        %789 = vmatmul.f32.gmra.mxu0 %v675
        %v790 = vpop.f32.mrf.mxu0
        %v791 = vadd.f32 %v651, %v790
        %792 = vmatmul.f32.gmra.mxu0 %v678
        %v793 = vpop.f32.mrf.mxu0
        %v794 = vadd.f32 %v651, %v793
        %795 = vmatmul.f32.gmra.mxu0 %v681
        %v796 = vpop.f32.mrf.mxu0
        %v797 = vadd.f32 %v651, %v796
        %798 = vmatmul.f32.gmra.mxu0 %v684
        %v799 = vpop.f32.mrf.mxu0
        %v800 = vadd.f32 %v651, %v799
        %801 = vmatmul.f32.gmra.mxu0 %v687
        %v802 = vpop.f32.mrf.mxu0
        %v803 = vadd.f32 %v651, %v802
        %804 = vmatmul.f32.gmra.mxu0 %v690
        %v805 = vpop.f32.mrf.mxu0
        %v806 = vadd.f32 %v651, %v805
        %807 = vmatmul.f32.gmra.mxu0 %v693
        %v808 = vpop.f32.mrf.mxu0
        %v809 = vadd.f32 %v651, %v808
        %810 = vmatmul.f32.gmra.mxu0 %v696
        %v811 = vpop.f32.mrf.mxu0
        %v812 = vadd.f32 %v651, %v811
        %813 = vmatmul.f32.gmra.mxu0 %v699
        %v814 = vpop.f32.mrf.mxu0
        %v815 = vadd.f32 %v651, %v814
        %816 = vmatmul.f32.gmra.mxu0 %v702
        %v817 = vpop.f32.mrf.mxu0
        %v818 = vadd.f32 %v651, %v817
        %819 = vmatmul.f32.gmra.mxu0 %v705
        %v820 = vpop.f32.mrf.mxu0
        %v821 = vadd.f32 %v651, %v820
        %822 = vmatmul.f32.gmra.mxu0 %v708
        %v823 = vpop.f32.mrf.mxu0
        %v824 = vadd.f32 %v651, %v823
        %825 = vmatmul.f32.gmra.mxu0 %v711
        %v826 = vpop.f32.mrf.mxu0
        %v827 = vadd.f32 %v651, %v826
        %828 = vmatmul.f32.gmra.mxu0 %v714
        %v829 = vpop.f32.mrf.mxu0
        %v830 = vadd.f32 %v651, %v829
        %831 = vmatmul.f32.gmra.mxu0 %v717
        %v832 = vpop.f32.mrf.mxu0
        %v833 = vadd.f32 %v651, %v832
        %834 = vmatmul.f32.gmra.mxu0 %v720
        %v835 = vpop.f32.mrf.mxu0
        %v836 = vadd.f32 %v651, %v835
        %837 = vmatmul.f32.gmra.mxu0 %v723
        %v838 = vpop.f32.mrf.mxu0
        %v839 = vadd.f32 %v651, %v838
        %840 = vmatmul.f32.gmra.mxu0 %v726
        %v841 = vpop.f32.mrf.mxu0
        %v842 = vadd.f32 %v651, %v841
        %843 = vmatmul.f32.gmra.mxu0 %v729
        %v844 = vpop.f32.mrf.mxu0
        %v845 = vadd.f32 %v651, %v844
        %846 = vmatmul.f32.gmra.mxu0 %v732
        %v847 = vpop.f32.mrf.mxu0
        %v848 = vadd.f32 %v651, %v847
        %849 = vmatmul.f32.gmra.mxu0 %v735
        %v850 = vpop.f32.mrf.mxu0
        %v851 = vadd.f32 %v651, %v850
        %852 = vmatmul.f32.gmra.mxu0 %v738
        %v853 = vpop.f32.mrf.mxu0
        %v854 = vadd.f32 %v651, %v853
        %855 = vmatmul.f32.gmra.mxu0 %v741
        %v856 = vpop.f32.mrf.mxu0
        %v857 = vadd.f32 %v651, %v856
        %858 = vmatmul.f32.gmra.mxu0 %v744
        %v859 = vpop.f32.mrf.mxu0
        %v860 = vadd.f32 %v651, %v859
        %861 = vmatmul.f32.gmra.mxu0 %v747
        %v862 = vpop.f32.mrf.mxu0
        %v863 = vadd.f32 %v651, %v862
        %864 = vmatmul.f32.gmra.mxu0 %v750
        %v865 = vpop.f32.mrf.mxu0
        %v866 = vadd.f32 %v651, %v865
        %867 = vmatmul.f32.gmra.mxu0 %v753
        %v868 = vpop.f32.mrf.mxu0
        %v869 = vadd.f32 %v651, %v868
        %870 = vmatmul.f32.gmra.mxu0 %v756
        %v871 = vpop.f32.mrf.mxu0
        %v872 = vadd.f32 %v651, %v871
        %873 = vmatmul.f32.gmra.mxu0 %v759
        %v874 = vpop.f32.mrf.mxu0
        %v875 = vadd.f32 %v651, %v874
        %876 = vdwg.mxu0
        %v877 = vxor.u32 %v782, 2147483648
        %v878 = vxor.u32 %v785, 2147483648
        %v879 = vxor.u32 %v788, 2147483648
        %v880 = vxor.u32 %v791, 2147483648
        %v881 = vxor.u32 %v794, 2147483648
        %v882 = vxor.u32 %v797, 2147483648
        %v883 = vxor.u32 %v800, 2147483648
        %v884 = vxor.u32 %v803, 2147483648
        %v885 = vxor.u32 %v806, 2147483648
        %v886 = vxor.u32 %v809, 2147483648
        %v887 = vxor.u32 %v812, 2147483648
        %v888 = vxor.u32 %v815, 2147483648
        %v889 = vxor.u32 %v818, 2147483648
        %v890 = vxor.u32 %v821, 2147483648
        %v891 = vxor.u32 %v824, 2147483648
        %v892 = vxor.u32 %v827, 2147483648
        %v893 = vxor.u32 %v830, 2147483648
        %v894 = vxor.u32 %v833, 2147483648
        %v895 = vxor.u32 %v836, 2147483648
        %v896 = vxor.u32 %v839, 2147483648
        %v897 = vxor.u32 %v842, 2147483648
        %v898 = vxor.u32 %v845, 2147483648
        %v899 = vxor.u32 %v848, 2147483648
        %v900 = vxor.u32 %v851, 2147483648
        %v901 = vxor.u32 %v854, 2147483648
        %v902 = vxor.u32 %v857, 2147483648
        %v903 = vxor.u32 %v860, 2147483648
        %v904 = vxor.u32 %v863, 2147483648
        %v905 = vxor.u32 %v866, 2147483648
        %v906 = vxor.u32 %v869, 2147483648
        %v907 = vxor.u32 %v872, 2147483648
        %v908 = vxor.u32 %v875, 2147483648
        %v909 = vmul.f32 %v877, 1.442695
        %v910 = vpow.pop %v909
        %v911 = vmul.f32 %v878, 1.442695
        %v912 = vpow.pop %v911
        %v913 = vmul.f32 %v879, 1.442695
        %v914 = vpow.pop %v913
        %v915 = vmul.f32 %v880, 1.442695
        %v916 = vpow.pop %v915
        %v917 = vmul.f32 %v881, 1.442695
        %v918 = vpow.pop %v917
        %v919 = vmul.f32 %v882, 1.442695
        %v920 = vpow.pop %v919
        %v921 = vmul.f32 %v883, 1.442695
        %v922 = vpow.pop %v921
        %v923 = vmul.f32 %v884, 1.442695
        %v924 = vpow.pop %v923
        %v925 = vmul.f32 %v885, 1.442695
        %v926 = vpow.pop %v925
        %v927 = vmul.f32 %v886, 1.442695
        %v928 = vpow.pop %v927
        %v929 = vmul.f32 %v887, 1.442695
        %v930 = vpow.pop %v929
        %v931 = vmul.f32 %v888, 1.442695
        %v932 = vpow.pop %v931
        %v933 = vmul.f32 %v889, 1.442695
        %v934 = vpow.pop %v933
        %v935 = vmul.f32 %v890, 1.442695
        %v936 = vpow.pop %v935
        %v937 = vmul.f32 %v891, 1.442695
        %v938 = vpow.pop %v937
        %v939 = vmul.f32 %v892, 1.442695
        %v940 = vpow.pop %v939
        %v941 = vmul.f32 %v893, 1.442695
        %v942 = vpow.pop %v941
        %v943 = vmul.f32 %v894, 1.442695
        %v944 = vpow.pop %v943
        %v945 = vmul.f32 %v895, 1.442695
        %v946 = vpow.pop %v945
        %v947 = vmul.f32 %v896, 1.442695
        %v948 = vpow.pop %v947
        %v949 = vmul.f32 %v897, 1.442695
        %v950 = vpow.pop %v949
        %v951 = vmul.f32 %v898, 1.442695
        %v952 = vpow.pop %v951
        %v953 = vmul.f32 %v899, 1.442695
        %v954 = vpow.pop %v953
        %v955 = vmul.f32 %v900, 1.442695
        %v956 = vpow.pop %v955
        %v957 = vmul.f32 %v901, 1.442695
        %v958 = vpow.pop %v957
        %v959 = vmul.f32 %v902, 1.442695
        %v960 = vpow.pop %v959
        %v961 = vmul.f32 %v903, 1.442695
        %v962 = vpow.pop %v961
        %v963 = vmul.f32 %v904, 1.442695
        %v964 = vpow.pop %v963
        %v965 = vmul.f32 %v905, 1.442695
        %v966 = vpow.pop %v965
        %v967 = vmul.f32 %v906, 1.442695
        %v968 = vpow.pop %v967
        %v969 = vmul.f32 %v907, 1.442695
        %v970 = vpow.pop %v969
        %v971 = vmul.f32 %v908, 1.442695
        %v972 = vpow.pop %v971
        %v973 = vadd.f32 %v910, 1.0
        %v974 = vadd.f32 %v912, 1.0
        %v975 = vadd.f32 %v914, 1.0
        %v976 = vadd.f32 %v916, 1.0
        %v977 = vadd.f32 %v918, 1.0
        %v978 = vadd.f32 %v920, 1.0
        %v979 = vadd.f32 %v922, 1.0
        %v980 = vadd.f32 %v924, 1.0
        %v981 = vadd.f32 %v926, 1.0
        %v982 = vadd.f32 %v928, 1.0
        %v983 = vadd.f32 %v930, 1.0
        %v984 = vadd.f32 %v932, 1.0
        %v985 = vadd.f32 %v934, 1.0
        %v986 = vadd.f32 %v936, 1.0
        %v987 = vadd.f32 %v938, 1.0
        %v988 = vadd.f32 %v940, 1.0
        %v989 = vadd.f32 %v942, 1.0
        %v990 = vadd.f32 %v944, 1.0
        %v991 = vadd.f32 %v946, 1.0
        %v992 = vadd.f32 %v948, 1.0
        %v993 = vadd.f32 %v950, 1.0
        %v994 = vadd.f32 %v952, 1.0
        %v995 = vadd.f32 %v954, 1.0
        %v996 = vadd.f32 %v956, 1.0
        %v997 = vadd.f32 %v958, 1.0
        %v998 = vadd.f32 %v960, 1.0
        %v999 = vadd.f32 %v962, 1.0
        %v1000 = vadd.f32 %v964, 1.0
        %v1001 = vadd.f32 %v966, 1.0
        %v1002 = vadd.f32 %v968, 1.0
        %v1003 = vadd.f32 %v970, 1.0
        %v1004 = vadd.f32 %v972, 1.0
        %v1005 = vrcp.pop %v973
        %v1006 = vmul.f32 %v973, %v1005
        %v1007 = vsub.f32 1.0, %v1006
        %v1008 = vmul.f32 %v1005, %v1007
        %v1009 = vadd.f32 %v1005, %v1008
        %vm1010 = vweird.f32 %v973
        %vm1011 = vweird.f32 %v1005
        %vm1012 = vmor %vm1010, %vm1011
        %v1013 = vsel %vm1012, %v1005, %v1009
        %v1014 = vand.u32 2147483647, %v973
        %vm1015 = vcmp.eq.f32.partialorder %v1014, 8.507059e+37
        %v1016 = vand.u32 %v973, 2147483648
        %v1017 = vor.u32 1.1754944e-38, %v1016
        %v1018 = vsel %vm1015, %v1017, %v1013
        %v1019 = vmul.f32 1.0, %v1018
        %v1020 = vrcp.pop %v974
        %v1021 = vmul.f32 %v974, %v1020
        %v1022 = vsub.f32 1.0, %v1021
        %v1023 = vmul.f32 %v1020, %v1022
        %v1024 = vadd.f32 %v1020, %v1023
        %vm1025 = vweird.f32 %v974
        %vm1026 = vweird.f32 %v1020
        %vm1027 = vmor %vm1025, %vm1026
        %v1028 = vsel %vm1027, %v1020, %v1024
        %v1029 = vand.u32 2147483647, %v974
        %vm1030 = vcmp.eq.f32.partialorder %v1029, 8.507059e+37
        %v1031 = vand.u32 %v974, 2147483648
        %v1032 = vor.u32 1.1754944e-38, %v1031
        %v1033 = vsel %vm1030, %v1032, %v1028
        %v1034 = vmul.f32 1.0, %v1033
        %v1035 = vrcp.pop %v975
        %v1036 = vmul.f32 %v975, %v1035
        %v1037 = vsub.f32 1.0, %v1036
        %v1038 = vmul.f32 %v1035, %v1037
        %v1039 = vadd.f32 %v1035, %v1038
        %vm1040 = vweird.f32 %v975
        %vm1041 = vweird.f32 %v1035
        %vm1042 = vmor %vm1040, %vm1041
        %v1043 = vsel %vm1042, %v1035, %v1039
        %v1044 = vand.u32 2147483647, %v975
        %vm1045 = vcmp.eq.f32.partialorder %v1044, 8.507059e+37
        %v1046 = vand.u32 %v975, 2147483648
        %v1047 = vor.u32 1.1754944e-38, %v1046
        %v1048 = vsel %vm1045, %v1047, %v1043
        %v1049 = vmul.f32 1.0, %v1048
        %v1050 = vrcp.pop %v976
        %v1051 = vmul.f32 %v976, %v1050
        %v1052 = vsub.f32 1.0, %v1051
        %v1053 = vmul.f32 %v1050, %v1052
        %v1054 = vadd.f32 %v1050, %v1053
        %vm1055 = vweird.f32 %v976
        %vm1056 = vweird.f32 %v1050
        %vm1057 = vmor %vm1055, %vm1056
        %v1058 = vsel %vm1057, %v1050, %v1054
        %v1059 = vand.u32 2147483647, %v976
        %vm1060 = vcmp.eq.f32.partialorder %v1059, 8.507059e+37
        %v1061 = vand.u32 %v976, 2147483648
        %v1062 = vor.u32 1.1754944e-38, %v1061
        %v1063 = vsel %vm1060, %v1062, %v1058
        %v1064 = vmul.f32 1.0, %v1063
        %v1065 = vrcp.pop %v977
        %v1066 = vmul.f32 %v977, %v1065
        %v1067 = vsub.f32 1.0, %v1066
        %v1068 = vmul.f32 %v1065, %v1067
        %v1069 = vadd.f32 %v1065, %v1068
        %vm1070 = vweird.f32 %v977
        %vm1071 = vweird.f32 %v1065
        %vm1072 = vmor %vm1070, %vm1071
        %v1073 = vsel %vm1072, %v1065, %v1069
        %v1074 = vand.u32 2147483647, %v977
        %vm1075 = vcmp.eq.f32.partialorder %v1074, 8.507059e+37
        %v1076 = vand.u32 %v977, 2147483648
        %v1077 = vor.u32 1.1754944e-38, %v1076
        %v1078 = vsel %vm1075, %v1077, %v1073
        %v1079 = vmul.f32 1.0, %v1078
        %v1080 = vrcp.pop %v978
        %v1081 = vmul.f32 %v978, %v1080
        %v1082 = vsub.f32 1.0, %v1081
        %v1083 = vmul.f32 %v1080, %v1082
        %v1084 = vadd.f32 %v1080, %v1083
        %vm1085 = vweird.f32 %v978
        %vm1086 = vweird.f32 %v1080
        %vm1087 = vmor %vm1085, %vm1086
        %v1088 = vsel %vm1087, %v1080, %v1084
        %v1089 = vand.u32 2147483647, %v978
        %vm1090 = vcmp.eq.f32.partialorder %v1089, 8.507059e+37
        %v1091 = vand.u32 %v978, 2147483648
        %v1092 = vor.u32 1.1754944e-38, %v1091
        %v1093 = vsel %vm1090, %v1092, %v1088
        %v1094 = vmul.f32 1.0, %v1093
        %v1095 = vrcp.pop %v979
        %v1096 = vmul.f32 %v979, %v1095
        %v1097 = vsub.f32 1.0, %v1096
        %v1098 = vmul.f32 %v1095, %v1097
        %v1099 = vadd.f32 %v1095, %v1098
        %vm1100 = vweird.f32 %v979
        %vm1101 = vweird.f32 %v1095
        %vm1102 = vmor %vm1100, %vm1101
        %v1103 = vsel %vm1102, %v1095, %v1099
        %v1104 = vand.u32 2147483647, %v979
        %vm1105 = vcmp.eq.f32.partialorder %v1104, 8.507059e+37
        %v1106 = vand.u32 %v979, 2147483648
        %v1107 = vor.u32 1.1754944e-38, %v1106
        %v1108 = vsel %vm1105, %v1107, %v1103
        %v1109 = vmul.f32 1.0, %v1108
        %v1110 = vrcp.pop %v980
        %v1111 = vmul.f32 %v980, %v1110
        %v1112 = vsub.f32 1.0, %v1111
        %v1113 = vmul.f32 %v1110, %v1112
        %v1114 = vadd.f32 %v1110, %v1113
        %vm1115 = vweird.f32 %v980
        %vm1116 = vweird.f32 %v1110
        %vm1117 = vmor %vm1115, %vm1116
        %v1118 = vsel %vm1117, %v1110, %v1114
        %v1119 = vand.u32 2147483647, %v980
        %vm1120 = vcmp.eq.f32.partialorder %v1119, 8.507059e+37
        %v1121 = vand.u32 %v980, 2147483648
        %v1122 = vor.u32 1.1754944e-38, %v1121
        %v1123 = vsel %vm1120, %v1122, %v1118
        %v1124 = vmul.f32 1.0, %v1123
        %v1125 = vrcp.pop %v981
        %v1126 = vmul.f32 %v981, %v1125
        %v1127 = vsub.f32 1.0, %v1126
        %v1128 = vmul.f32 %v1125, %v1127
        %v1129 = vadd.f32 %v1125, %v1128
        %vm1130 = vweird.f32 %v981
        %vm1131 = vweird.f32 %v1125
        %vm1132 = vmor %vm1130, %vm1131
        %v1133 = vsel %vm1132, %v1125, %v1129
        %v1134 = vand.u32 2147483647, %v981
        %vm1135 = vcmp.eq.f32.partialorder %v1134, 8.507059e+37
        %v1136 = vand.u32 %v981, 2147483648
        %v1137 = vor.u32 1.1754944e-38, %v1136
        %v1138 = vsel %vm1135, %v1137, %v1133
        %v1139 = vmul.f32 1.0, %v1138
        %v1140 = vrcp.pop %v982
        %v1141 = vmul.f32 %v982, %v1140
        %v1142 = vsub.f32 1.0, %v1141
        %v1143 = vmul.f32 %v1140, %v1142
        %v1144 = vadd.f32 %v1140, %v1143
        %vm1145 = vweird.f32 %v982
        %vm1146 = vweird.f32 %v1140
        %vm1147 = vmor %vm1145, %vm1146
        %v1148 = vsel %vm1147, %v1140, %v1144
        %v1149 = vand.u32 2147483647, %v982
        %vm1150 = vcmp.eq.f32.partialorder %v1149, 8.507059e+37
        %v1151 = vand.u32 %v982, 2147483648
        %v1152 = vor.u32 1.1754944e-38, %v1151
        %v1153 = vsel %vm1150, %v1152, %v1148
        %v1154 = vmul.f32 1.0, %v1153
        %v1155 = vrcp.pop %v983
        %v1156 = vmul.f32 %v983, %v1155
        %v1157 = vsub.f32 1.0, %v1156
        %v1158 = vmul.f32 %v1155, %v1157
        %v1159 = vadd.f32 %v1155, %v1158
        %vm1160 = vweird.f32 %v983
        %vm1161 = vweird.f32 %v1155
        %vm1162 = vmor %vm1160, %vm1161
        %v1163 = vsel %vm1162, %v1155, %v1159
        %v1164 = vand.u32 2147483647, %v983
        %vm1165 = vcmp.eq.f32.partialorder %v1164, 8.507059e+37
        %v1166 = vand.u32 %v983, 2147483648
        %v1167 = vor.u32 1.1754944e-38, %v1166
        %v1168 = vsel %vm1165, %v1167, %v1163
        %v1169 = vmul.f32 1.0, %v1168
        %v1170 = vrcp.pop %v984
        %v1171 = vmul.f32 %v984, %v1170
        %v1172 = vsub.f32 1.0, %v1171
        %v1173 = vmul.f32 %v1170, %v1172
        %v1174 = vadd.f32 %v1170, %v1173
        %vm1175 = vweird.f32 %v984
        %vm1176 = vweird.f32 %v1170
        %vm1177 = vmor %vm1175, %vm1176
        %v1178 = vsel %vm1177, %v1170, %v1174
        %v1179 = vand.u32 2147483647, %v984
        %vm1180 = vcmp.eq.f32.partialorder %v1179, 8.507059e+37
        %v1181 = vand.u32 %v984, 2147483648
        %v1182 = vor.u32 1.1754944e-38, %v1181
        %v1183 = vsel %vm1180, %v1182, %v1178
        %v1184 = vmul.f32 1.0, %v1183
        %v1185 = vrcp.pop %v985
        %v1186 = vmul.f32 %v985, %v1185
        %v1187 = vsub.f32 1.0, %v1186
        %v1188 = vmul.f32 %v1185, %v1187
        %v1189 = vadd.f32 %v1185, %v1188
        %vm1190 = vweird.f32 %v985
        %vm1191 = vweird.f32 %v1185
        %vm1192 = vmor %vm1190, %vm1191
        %v1193 = vsel %vm1192, %v1185, %v1189
        %v1194 = vand.u32 2147483647, %v985
        %vm1195 = vcmp.eq.f32.partialorder %v1194, 8.507059e+37
        %v1196 = vand.u32 %v985, 2147483648
        %v1197 = vor.u32 1.1754944e-38, %v1196
        %v1198 = vsel %vm1195, %v1197, %v1193
        %v1199 = vmul.f32 1.0, %v1198
        %v1200 = vrcp.pop %v986
        %v1201 = vmul.f32 %v986, %v1200
        %v1202 = vsub.f32 1.0, %v1201
        %v1203 = vmul.f32 %v1200, %v1202
        %v1204 = vadd.f32 %v1200, %v1203
        %vm1205 = vweird.f32 %v986
        %vm1206 = vweird.f32 %v1200
        %vm1207 = vmor %vm1205, %vm1206
        %v1208 = vsel %vm1207, %v1200, %v1204
        %v1209 = vand.u32 2147483647, %v986
        %vm1210 = vcmp.eq.f32.partialorder %v1209, 8.507059e+37
        %v1211 = vand.u32 %v986, 2147483648
        %v1212 = vor.u32 1.1754944e-38, %v1211
        %v1213 = vsel %vm1210, %v1212, %v1208
        %v1214 = vmul.f32 1.0, %v1213
        %v1215 = vrcp.pop %v987
        %v1216 = vmul.f32 %v987, %v1215
        %v1217 = vsub.f32 1.0, %v1216
        %v1218 = vmul.f32 %v1215, %v1217
        %v1219 = vadd.f32 %v1215, %v1218
        %vm1220 = vweird.f32 %v987
        %vm1221 = vweird.f32 %v1215
        %vm1222 = vmor %vm1220, %vm1221
        %v1223 = vsel %vm1222, %v1215, %v1219
        %v1224 = vand.u32 2147483647, %v987
        %vm1225 = vcmp.eq.f32.partialorder %v1224, 8.507059e+37
        %v1226 = vand.u32 %v987, 2147483648
        %v1227 = vor.u32 1.1754944e-38, %v1226
        %v1228 = vsel %vm1225, %v1227, %v1223
        %v1229 = vmul.f32 1.0, %v1228
        %v1230 = vrcp.pop %v988
        %v1231 = vmul.f32 %v988, %v1230
        %v1232 = vsub.f32 1.0, %v1231
        %v1233 = vmul.f32 %v1230, %v1232
        %v1234 = vadd.f32 %v1230, %v1233
        %vm1235 = vweird.f32 %v988
        %vm1236 = vweird.f32 %v1230
        %vm1237 = vmor %vm1235, %vm1236
        %v1238 = vsel %vm1237, %v1230, %v1234
        %v1239 = vand.u32 2147483647, %v988
        %vm1240 = vcmp.eq.f32.partialorder %v1239, 8.507059e+37
        %v1241 = vand.u32 %v988, 2147483648
        %v1242 = vor.u32 1.1754944e-38, %v1241
        %v1243 = vsel %vm1240, %v1242, %v1238
        %v1244 = vmul.f32 1.0, %v1243
        %v1245 = vrcp.pop %v989
        %v1246 = vmul.f32 %v989, %v1245
        %v1247 = vsub.f32 1.0, %v1246
        %v1248 = vmul.f32 %v1245, %v1247
        %v1249 = vadd.f32 %v1245, %v1248
        %vm1250 = vweird.f32 %v989
        %vm1251 = vweird.f32 %v1245
        %vm1252 = vmor %vm1250, %vm1251
        %v1253 = vsel %vm1252, %v1245, %v1249
        %v1254 = vand.u32 2147483647, %v989
        %vm1255 = vcmp.eq.f32.partialorder %v1254, 8.507059e+37
        %v1256 = vand.u32 %v989, 2147483648
        %v1257 = vor.u32 1.1754944e-38, %v1256
        %v1258 = vsel %vm1255, %v1257, %v1253
        %v1259 = vmul.f32 1.0, %v1258
        %v1260 = vrcp.pop %v990
        %v1261 = vmul.f32 %v990, %v1260
        %v1262 = vsub.f32 1.0, %v1261
        %v1263 = vmul.f32 %v1260, %v1262
        %v1264 = vadd.f32 %v1260, %v1263
        %vm1265 = vweird.f32 %v990
        %vm1266 = vweird.f32 %v1260
        %vm1267 = vmor %vm1265, %vm1266
        %v1268 = vsel %vm1267, %v1260, %v1264
        %v1269 = vand.u32 2147483647, %v990
        %vm1270 = vcmp.eq.f32.partialorder %v1269, 8.507059e+37
        %v1271 = vand.u32 %v990, 2147483648
        %v1272 = vor.u32 1.1754944e-38, %v1271
        %v1273 = vsel %vm1270, %v1272, %v1268
        %v1274 = vmul.f32 1.0, %v1273
        %v1275 = vrcp.pop %v991
        %v1276 = vmul.f32 %v991, %v1275
        %v1277 = vsub.f32 1.0, %v1276
        %v1278 = vmul.f32 %v1275, %v1277
        %v1279 = vadd.f32 %v1275, %v1278
        %vm1280 = vweird.f32 %v991
        %vm1281 = vweird.f32 %v1275
        %vm1282 = vmor %vm1280, %vm1281
        %v1283 = vsel %vm1282, %v1275, %v1279
        %v1284 = vand.u32 2147483647, %v991
        %vm1285 = vcmp.eq.f32.partialorder %v1284, 8.507059e+37
        %v1286 = vand.u32 %v991, 2147483648
        %v1287 = vor.u32 1.1754944e-38, %v1286
        %v1288 = vsel %vm1285, %v1287, %v1283
        %v1289 = vmul.f32 1.0, %v1288
        %v1290 = vrcp.pop %v992
        %v1291 = vmul.f32 %v992, %v1290
        %v1292 = vsub.f32 1.0, %v1291
        %v1293 = vmul.f32 %v1290, %v1292
        %v1294 = vadd.f32 %v1290, %v1293
        %vm1295 = vweird.f32 %v992
        %vm1296 = vweird.f32 %v1290
        %vm1297 = vmor %vm1295, %vm1296
        %v1298 = vsel %vm1297, %v1290, %v1294
        %v1299 = vand.u32 2147483647, %v992
        %vm1300 = vcmp.eq.f32.partialorder %v1299, 8.507059e+37
        %v1301 = vand.u32 %v992, 2147483648
        %v1302 = vor.u32 1.1754944e-38, %v1301
        %v1303 = vsel %vm1300, %v1302, %v1298
        %v1304 = vmul.f32 1.0, %v1303
        %v1305 = vrcp.pop %v993
        %v1306 = vmul.f32 %v993, %v1305
        %v1307 = vsub.f32 1.0, %v1306
        %v1308 = vmul.f32 %v1305, %v1307
        %v1309 = vadd.f32 %v1305, %v1308
        %vm1310 = vweird.f32 %v993
        %vm1311 = vweird.f32 %v1305
        %vm1312 = vmor %vm1310, %vm1311
        %v1313 = vsel %vm1312, %v1305, %v1309
        %v1314 = vand.u32 2147483647, %v993
        %vm1315 = vcmp.eq.f32.partialorder %v1314, 8.507059e+37
        %v1316 = vand.u32 %v993, 2147483648
        %v1317 = vor.u32 1.1754944e-38, %v1316
        %v1318 = vsel %vm1315, %v1317, %v1313
        %v1319 = vmul.f32 1.0, %v1318
        %v1320 = vrcp.pop %v994
        %v1321 = vmul.f32 %v994, %v1320
        %v1322 = vsub.f32 1.0, %v1321
        %v1323 = vmul.f32 %v1320, %v1322
        %v1324 = vadd.f32 %v1320, %v1323
        %vm1325 = vweird.f32 %v994
        %vm1326 = vweird.f32 %v1320
        %vm1327 = vmor %vm1325, %vm1326
        %v1328 = vsel %vm1327, %v1320, %v1324
        %v1329 = vand.u32 2147483647, %v994
        %vm1330 = vcmp.eq.f32.partialorder %v1329, 8.507059e+37
        %v1331 = vand.u32 %v994, 2147483648
        %v1332 = vor.u32 1.1754944e-38, %v1331
        %v1333 = vsel %vm1330, %v1332, %v1328
        %v1334 = vmul.f32 1.0, %v1333
        %v1335 = vrcp.pop %v995
        %v1336 = vmul.f32 %v995, %v1335
        %v1337 = vsub.f32 1.0, %v1336
        %v1338 = vmul.f32 %v1335, %v1337
        %v1339 = vadd.f32 %v1335, %v1338
        %vm1340 = vweird.f32 %v995
        %vm1341 = vweird.f32 %v1335
        %vm1342 = vmor %vm1340, %vm1341
        %v1343 = vsel %vm1342, %v1335, %v1339
        %v1344 = vand.u32 2147483647, %v995
        %vm1345 = vcmp.eq.f32.partialorder %v1344, 8.507059e+37
        %v1346 = vand.u32 %v995, 2147483648
        %v1347 = vor.u32 1.1754944e-38, %v1346
        %v1348 = vsel %vm1345, %v1347, %v1343
        %v1349 = vmul.f32 1.0, %v1348
        %v1350 = vrcp.pop %v996
        %v1351 = vmul.f32 %v996, %v1350
        %v1352 = vsub.f32 1.0, %v1351
        %v1353 = vmul.f32 %v1350, %v1352
        %v1354 = vadd.f32 %v1350, %v1353
        %vm1355 = vweird.f32 %v996
        %vm1356 = vweird.f32 %v1350
        %vm1357 = vmor %vm1355, %vm1356
        %v1358 = vsel %vm1357, %v1350, %v1354
        %v1359 = vand.u32 2147483647, %v996
        %vm1360 = vcmp.eq.f32.partialorder %v1359, 8.507059e+37
        %v1361 = vand.u32 %v996, 2147483648
        %v1362 = vor.u32 1.1754944e-38, %v1361
        %v1363 = vsel %vm1360, %v1362, %v1358
        %v1364 = vmul.f32 1.0, %v1363
        %v1365 = vrcp.pop %v997
        %v1366 = vmul.f32 %v997, %v1365
        %v1367 = vsub.f32 1.0, %v1366
        %v1368 = vmul.f32 %v1365, %v1367
        %v1369 = vadd.f32 %v1365, %v1368
        %vm1370 = vweird.f32 %v997
        %vm1371 = vweird.f32 %v1365
        %vm1372 = vmor %vm1370, %vm1371
        %v1373 = vsel %vm1372, %v1365, %v1369
        %v1374 = vand.u32 2147483647, %v997
        %vm1375 = vcmp.eq.f32.partialorder %v1374, 8.507059e+37
        %v1376 = vand.u32 %v997, 2147483648
        %v1377 = vor.u32 1.1754944e-38, %v1376
        %v1378 = vsel %vm1375, %v1377, %v1373
        %v1379 = vmul.f32 1.0, %v1378
        %v1380 = vrcp.pop %v998
        %v1381 = vmul.f32 %v998, %v1380
        %v1382 = vsub.f32 1.0, %v1381
        %v1383 = vmul.f32 %v1380, %v1382
        %v1384 = vadd.f32 %v1380, %v1383
        %vm1385 = vweird.f32 %v998
        %vm1386 = vweird.f32 %v1380
        %vm1387 = vmor %vm1385, %vm1386
        %v1388 = vsel %vm1387, %v1380, %v1384
        %v1389 = vand.u32 2147483647, %v998
        %vm1390 = vcmp.eq.f32.partialorder %v1389, 8.507059e+37
        %v1391 = vand.u32 %v998, 2147483648
        %v1392 = vor.u32 1.1754944e-38, %v1391
        %v1393 = vsel %vm1390, %v1392, %v1388
        %v1394 = vmul.f32 1.0, %v1393
        %v1395 = vrcp.pop %v999
        %v1396 = vmul.f32 %v999, %v1395
        %v1397 = vsub.f32 1.0, %v1396
        %v1398 = vmul.f32 %v1395, %v1397
        %v1399 = vadd.f32 %v1395, %v1398
        %vm1400 = vweird.f32 %v999
        %vm1401 = vweird.f32 %v1395
        %vm1402 = vmor %vm1400, %vm1401
        %v1403 = vsel %vm1402, %v1395, %v1399
        %v1404 = vand.u32 2147483647, %v999
        %vm1405 = vcmp.eq.f32.partialorder %v1404, 8.507059e+37
        %v1406 = vand.u32 %v999, 2147483648
        %v1407 = vor.u32 1.1754944e-38, %v1406
        %v1408 = vsel %vm1405, %v1407, %v1403
        %v1409 = vmul.f32 1.0, %v1408
        %v1410 = vrcp.pop %v1000
        %v1411 = vmul.f32 %v1000, %v1410
        %v1412 = vsub.f32 1.0, %v1411
        %v1413 = vmul.f32 %v1410, %v1412
        %v1414 = vadd.f32 %v1410, %v1413
        %vm1415 = vweird.f32 %v1000
        %vm1416 = vweird.f32 %v1410
        %vm1417 = vmor %vm1415, %vm1416
        %v1418 = vsel %vm1417, %v1410, %v1414
        %v1419 = vand.u32 2147483647, %v1000
        %vm1420 = vcmp.eq.f32.partialorder %v1419, 8.507059e+37
        %v1421 = vand.u32 %v1000, 2147483648
        %v1422 = vor.u32 1.1754944e-38, %v1421
        %v1423 = vsel %vm1420, %v1422, %v1418
        %v1424 = vmul.f32 1.0, %v1423
        %v1425 = vrcp.pop %v1001
        %v1426 = vmul.f32 %v1001, %v1425
        %v1427 = vsub.f32 1.0, %v1426
        %v1428 = vmul.f32 %v1425, %v1427
        %v1429 = vadd.f32 %v1425, %v1428
        %vm1430 = vweird.f32 %v1001
        %vm1431 = vweird.f32 %v1425
        %vm1432 = vmor %vm1430, %vm1431
        %v1433 = vsel %vm1432, %v1425, %v1429
        %v1434 = vand.u32 2147483647, %v1001
        %vm1435 = vcmp.eq.f32.partialorder %v1434, 8.507059e+37
        %v1436 = vand.u32 %v1001, 2147483648
        %v1437 = vor.u32 1.1754944e-38, %v1436
        %v1438 = vsel %vm1435, %v1437, %v1433
        %v1439 = vmul.f32 1.0, %v1438
        %v1440 = vrcp.pop %v1002
        %v1441 = vmul.f32 %v1002, %v1440
        %v1442 = vsub.f32 1.0, %v1441
        %v1443 = vmul.f32 %v1440, %v1442
        %v1444 = vadd.f32 %v1440, %v1443
        %vm1445 = vweird.f32 %v1002
        %vm1446 = vweird.f32 %v1440
        %vm1447 = vmor %vm1445, %vm1446
        %v1448 = vsel %vm1447, %v1440, %v1444
        %v1449 = vand.u32 2147483647, %v1002
        %vm1450 = vcmp.eq.f32.partialorder %v1449, 8.507059e+37
        %v1451 = vand.u32 %v1002, 2147483648
        %v1452 = vor.u32 1.1754944e-38, %v1451
        %v1453 = vsel %vm1450, %v1452, %v1448
        %v1454 = vmul.f32 1.0, %v1453
        %v1455 = vrcp.pop %v1003
        %v1456 = vmul.f32 %v1003, %v1455
        %v1457 = vsub.f32 1.0, %v1456
        %v1458 = vmul.f32 %v1455, %v1457
        %v1459 = vadd.f32 %v1455, %v1458
        %vm1460 = vweird.f32 %v1003
        %vm1461 = vweird.f32 %v1455
        %vm1462 = vmor %vm1460, %vm1461
        %v1463 = vsel %vm1462, %v1455, %v1459
        %v1464 = vand.u32 2147483647, %v1003
        %vm1465 = vcmp.eq.f32.partialorder %v1464, 8.507059e+37
        %v1466 = vand.u32 %v1003, 2147483648
        %v1467 = vor.u32 1.1754944e-38, %v1466
        %v1468 = vsel %vm1465, %v1467, %v1463
        %v1469 = vmul.f32 1.0, %v1468
        %v1470 = vrcp.pop %v1004
        %v1471 = vmul.f32 %v1004, %v1470
        %v1472 = vsub.f32 1.0, %v1471
        %v1473 = vmul.f32 %v1470, %v1472
        %v1474 = vadd.f32 %v1470, %v1473
        %vm1475 = vweird.f32 %v1004
        %vm1476 = vweird.f32 %v1470
        %vm1477 = vmor %vm1475, %vm1476
        %v1478 = vsel %vm1477, %v1470, %v1474
        %v1479 = vand.u32 2147483647, %v1004
        %vm1480 = vcmp.eq.f32.partialorder %v1479, 8.507059e+37
        %v1481 = vand.u32 %v1004, 2147483648
        %v1482 = vor.u32 1.1754944e-38, %v1481
        %v1483 = vsel %vm1480, %v1482, %v1478
        %v1484 = vmul.f32 1.0, %v1483
        %v1485 = vmul.f32 %v782, %v1019
        %v1486 = vmul.f32 %v785, %v1034
        %v1487 = vmul.f32 %v788, %v1049
        %v1488 = vmul.f32 %v791, %v1064
        %v1489 = vmul.f32 %v794, %v1079
        %v1490 = vmul.f32 %v797, %v1094
        %v1491 = vmul.f32 %v800, %v1109
        %v1492 = vmul.f32 %v803, %v1124
        %v1493 = vmul.f32 %v806, %v1139
        %v1494 = vmul.f32 %v809, %v1154
        %v1495 = vmul.f32 %v812, %v1169
        %v1496 = vmul.f32 %v815, %v1184
        %v1497 = vmul.f32 %v818, %v1199
        %v1498 = vmul.f32 %v821, %v1214
        %v1499 = vmul.f32 %v824, %v1229
        %v1500 = vmul.f32 %v827, %v1244
        %v1501 = vmul.f32 %v830, %v1259
        %v1502 = vmul.f32 %v833, %v1274
        %v1503 = vmul.f32 %v836, %v1289
        %v1504 = vmul.f32 %v839, %v1304
        %v1505 = vmul.f32 %v842, %v1319
        %v1506 = vmul.f32 %v845, %v1334
        %v1507 = vmul.f32 %v848, %v1349
        %v1508 = vmul.f32 %v851, %v1364
        %v1509 = vmul.f32 %v854, %v1379
        %v1510 = vmul.f32 %v857, %v1394
        %v1511 = vmul.f32 %v860, %v1409
        %v1512 = vmul.f32 %v863, %v1424
        %v1513 = vmul.f32 %v866, %v1439
        %v1514 = vmul.f32 %v869, %v1454
        %v1515 = vmul.f32 %v872, %v1469
        %v1516 = vmul.f32 %v875, %v1484
        %s1517 = scalar_lea.vmem [#allocation3], 16
        %vm1518 = vcmask 64512
        %1519 = vst.msk [vmem:[%s1517] sm:$0xff] %vm1518, %v1485
        %1520 = vst.msk [vmem:[%s1517 + $0x8] sm:$0xff] %vm1518, %v1486
        %1521 = vst.msk [vmem:[%s1517 + $0x10] sm:$0xff] %vm1518, %v1487
        %1522 = vst.msk [vmem:[%s1517 + $0x18] sm:$0xff] %vm1518, %v1488
        %1523 = vst.msk [vmem:[%s1517 + $0x20] sm:$0xff] %vm1518, %v1489
        %1524 = vst.msk [vmem:[%s1517 + $0x28] sm:$0xff] %vm1518, %v1490
        %1525 = vst.msk [vmem:[%s1517 + $0x30] sm:$0xff] %vm1518, %v1491
        %1526 = vst.msk [vmem:[%s1517 + $0x38] sm:$0xff] %vm1518, %v1492
        %1527 = vst.msk [vmem:[%s1517 + $0x40] sm:$0xff] %vm1518, %v1493
        %1528 = vst.msk [vmem:[%s1517 + $0x48] sm:$0xff] %vm1518, %v1494
        %1529 = vst.msk [vmem:[%s1517 + $0x50] sm:$0xff] %vm1518, %v1495
        %1530 = vst.msk [vmem:[%s1517 + $0x58] sm:$0xff] %vm1518, %v1496
        %1531 = vst.msk [vmem:[%s1517 + $0x60] sm:$0xff] %vm1518, %v1497
        %1532 = vst.msk [vmem:[%s1517 + $0x68] sm:$0xff] %vm1518, %v1498
        %1533 = vst.msk [vmem:[%s1517 + $0x70] sm:$0xff] %vm1518, %v1499
        %1534 = vst.msk [vmem:[%s1517 + $0x78] sm:$0xff] %vm1518, %v1500
        %1535 = vst.msk [vmem:[%s1517 + $0x80] sm:$0xff] %vm1518, %v1501
        %1536 = vst.msk [vmem:[%s1517 + $0x88] sm:$0xff] %vm1518, %v1502
        %1537 = vst.msk [vmem:[%s1517 + $0x90] sm:$0xff] %vm1518, %v1503
        %1538 = vst.msk [vmem:[%s1517 + $0x98] sm:$0xff] %vm1518, %v1504
        %1539 = vst.msk [vmem:[%s1517 + $0xa0] sm:$0xff] %vm1518, %v1505
        %1540 = vst.msk [vmem:[%s1517 + $0xa8] sm:$0xff] %vm1518, %v1506
        %1541 = vst.msk [vmem:[%s1517 + $0xb0] sm:$0xff] %vm1518, %v1507
        %1542 = vst.msk [vmem:[%s1517 + $0xb8] sm:$0xff] %vm1518, %v1508
        %1543 = vst.msk [vmem:[%s1517 + $0xc0] sm:$0xff] %vm1518, %v1509
        %1544 = vst.msk [vmem:[%s1517 + $0xc8] sm:$0xff] %vm1518, %v1510
        %1545 = vst.msk [vmem:[%s1517 + $0xd0] sm:$0xff] %vm1518, %v1511
        %1546 = vst.msk [vmem:[%s1517 + $0xd8] sm:$0xff] %vm1518, %v1512
        %1547 = vst.msk [vmem:[%s1517 + $0xe0] sm:$0xff] %vm1518, %v1513
        %1548 = vst.msk [vmem:[%s1517 + $0xe8] sm:$0xff] %vm1518, %v1514
        %1549 = vst.msk [vmem:[#allocation3] sm:$0xff] %vm1518, 0.0
        %1550 = vst.msk [vmem:[#allocation3 + $0x8] sm:$0xff] %vm1518, 0.0
        %1583 = vrot.lane.b32.xlu0 %v1485, 8
        %v1584 = vpop.permute.xlu0 %1583
        %1585 = vrot.lane.b32.xlu0 %v1486, 8
        %v1586 = vpop.permute.xlu0 %1585
        %1587 = vrot.lane.b32.xlu0 %v1487, 8
        %v1588 = vpop.permute.xlu0 %1587
        %1589 = vrot.lane.b32.xlu0 %v1488, 8
        %v1590 = vpop.permute.xlu0 %1589
        %1591 = vrot.lane.b32.xlu0 %v1489, 8
        %v1592 = vpop.permute.xlu0 %1591
        %1593 = vrot.lane.b32.xlu0 %v1490, 8
        %v1594 = vpop.permute.xlu0 %1593
        %1595 = vrot.lane.b32.xlu0 %v1491, 8
        %v1596 = vpop.permute.xlu0 %1595
        %1597 = vrot.lane.b32.xlu0 %v1492, 8
        %v1598 = vpop.permute.xlu0 %1597
        %1599 = vrot.lane.b32.xlu0 %v1493, 8
        %v1600 = vpop.permute.xlu0 %1599
        %1601 = vrot.lane.b32.xlu0 %v1494, 8
        %v1602 = vpop.permute.xlu0 %1601
        %1603 = vrot.lane.b32.xlu0 %v1495, 8
        %v1604 = vpop.permute.xlu0 %1603
        %1605 = vrot.lane.b32.xlu0 %v1496, 8
        %v1606 = vpop.permute.xlu0 %1605
        %1607 = vrot.lane.b32.xlu0 %v1497, 8
        %v1608 = vpop.permute.xlu0 %1607
        %1609 = vrot.lane.b32.xlu0 %v1498, 8
        %v1610 = vpop.permute.xlu0 %1609
        %1611 = vrot.lane.b32.xlu0 %v1499, 8
        %v1612 = vpop.permute.xlu0 %1611
        %1613 = vrot.lane.b32.xlu0 %v1500, 8
        %v1614 = vpop.permute.xlu0 %1613
        %1615 = vrot.lane.b32.xlu0 %v1501, 8
        %v1616 = vpop.permute.xlu0 %1615
        %1617 = vrot.lane.b32.xlu0 %v1502, 8
        %v1618 = vpop.permute.xlu0 %1617
        %1619 = vrot.lane.b32.xlu0 %v1503, 8
        %v1620 = vpop.permute.xlu0 %1619
        %1621 = vrot.lane.b32.xlu0 %v1504, 8
        %v1622 = vpop.permute.xlu0 %1621
        %1623 = vrot.lane.b32.xlu0 %v1505, 8
        %v1624 = vpop.permute.xlu0 %1623
        %1625 = vrot.lane.b32.xlu0 %v1506, 8
        %v1626 = vpop.permute.xlu0 %1625
        %1627 = vrot.lane.b32.xlu0 %v1507, 8
        %v1628 = vpop.permute.xlu0 %1627
        %1629 = vrot.lane.b32.xlu0 %v1508, 8
        %v1630 = vpop.permute.xlu0 %1629
        %1631 = vrot.lane.b32.xlu0 %v1509, 8
        %v1632 = vpop.permute.xlu0 %1631
        %1633 = vrot.lane.b32.xlu0 %v1510, 8
        %v1634 = vpop.permute.xlu0 %1633
        %1635 = vrot.lane.b32.xlu0 %v1511, 8
        %v1636 = vpop.permute.xlu0 %1635
        %1637 = vrot.lane.b32.xlu0 %v1512, 8
        %v1638 = vpop.permute.xlu0 %1637
        %1639 = vrot.lane.b32.xlu0 %v1513, 8
        %v1640 = vpop.permute.xlu0 %1639
        %1641 = vrot.lane.b32.xlu0 %v1514, 8
        %v1642 = vpop.permute.xlu0 %1641
        %1643 = vrot.lane.b32.xlu0 %v1515, 8
        %v1644 = vpop.permute.xlu0 %1643
        %1645 = vrot.lane.b32.xlu0 %v1516, 8
        %v1646 = vpop.permute.xlu0 %1645
        %vm1679 = vcmask 130112
        %1680 = vst.msk [vmem:[#allocation3] sm:$0xff] %vm1679, %v1584
        %1681 = vst.msk [vmem:[#allocation3 + $0x8] sm:$0xff] %vm1679, %v1586
        %1682 = vst.msk [vmem:[#allocation3 + $0x10] sm:$0xff] %vm1679, %v1588
        %1683 = vst.msk [vmem:[#allocation3 + $0x18] sm:$0xff] %vm1679, %v1590
        %1684 = vst.msk [vmem:[#allocation3 + $0x20] sm:$0xff] %vm1679, %v1592
        %1685 = vst.msk [vmem:[#allocation3 + $0x28] sm:$0xff] %vm1679, %v1594
        %1686 = vst.msk [vmem:[#allocation3 + $0x30] sm:$0xff] %vm1679, %v1596
        %1687 = vst.msk [vmem:[#allocation3 + $0x38] sm:$0xff] %vm1679, %v1598
        %1688 = vst.msk [vmem:[#allocation3 + $0x40] sm:$0xff] %vm1679, %v1600
        %1689 = vst.msk [vmem:[#allocation3 + $0x48] sm:$0xff] %vm1679, %v1602
        %1690 = vst.msk [vmem:[#allocation3 + $0x50] sm:$0xff] %vm1679, %v1604
        %1691 = vst.msk [vmem:[#allocation3 + $0x58] sm:$0xff] %vm1679, %v1606
        %1692 = vst.msk [vmem:[#allocation3 + $0x60] sm:$0xff] %vm1679, %v1608
        %1693 = vst.msk [vmem:[#allocation3 + $0x68] sm:$0xff] %vm1679, %v1610
        %1694 = vst.msk [vmem:[#allocation3 + $0x70] sm:$0xff] %vm1679, %v1612
        %1695 = vst.msk [vmem:[#allocation3 + $0x78] sm:$0xff] %vm1679, %v1614
        %1696 = vst.msk [vmem:[#allocation3 + $0x80] sm:$0xff] %vm1679, %v1616
        %1697 = vst.msk [vmem:[#allocation3 + $0x88] sm:$0xff] %vm1679, %v1618
        %1698 = vst.msk [vmem:[#allocation3 + $0x90] sm:$0xff] %vm1679, %v1620
        %1699 = vst.msk [vmem:[#allocation3 + $0x98] sm:$0xff] %vm1679, %v1622
        %1700 = vst.msk [vmem:[#allocation3 + $0xa0] sm:$0xff] %vm1679, %v1624
        %1701 = vst.msk [vmem:[#allocation3 + $0xa8] sm:$0xff] %vm1679, %v1626
        %1702 = vst.msk [vmem:[#allocation3 + $0xb0] sm:$0xff] %vm1679, %v1628
        %1703 = vst.msk [vmem:[#allocation3 + $0xb8] sm:$0xff] %vm1679, %v1630
        %1704 = vst.msk [vmem:[#allocation3 + $0xc0] sm:$0xff] %vm1679, %v1632
        %1705 = vst.msk [vmem:[#allocation3 + $0xc8] sm:$0xff] %vm1679, %v1634
        %1706 = vst.msk [vmem:[#allocation3 + $0xd0] sm:$0xff] %vm1679, %v1636
        %1707 = vst.msk [vmem:[#allocation3 + $0xd8] sm:$0xff] %vm1679, %v1638
        %1708 = vst.msk [vmem:[#allocation3 + $0xe0] sm:$0xff] %vm1679, %v1640
        %1709 = vst.msk [vmem:[#allocation3 + $0xe8] sm:$0xff] %vm1679, %v1642
        %1710 = vst.msk [vmem:[#allocation3 + $0xf0] sm:$0xff] %vm1679, %v1644
        %1711 = vst.msk [vmem:[#allocation3 + $0xf8] sm:$0xff] %vm1679, %v1646
        %1712 = vrot.lane.b32.xlu0 %v1487, 16
        %v1713 = vpop.permute.xlu0 %1712
        %1714 = vrot.lane.b32.xlu0 %v1488, 16
        %v1715 = vpop.permute.xlu0 %1714
        %1716 = vrot.lane.b32.xlu0 %v1489, 16
        %v1717 = vpop.permute.xlu0 %1716
        %1718 = vrot.lane.b32.xlu0 %v1490, 16
        %v1719 = vpop.permute.xlu0 %1718
        %1720 = vrot.lane.b32.xlu0 %v1491, 16
        %v1721 = vpop.permute.xlu0 %1720
        %1722 = vrot.lane.b32.xlu0 %v1492, 16
        %v1723 = vpop.permute.xlu0 %1722
        %1724 = vrot.lane.b32.xlu0 %v1493, 16
        %v1725 = vpop.permute.xlu0 %1724
        %1726 = vrot.lane.b32.xlu0 %v1494, 16
        %v1727 = vpop.permute.xlu0 %1726
        %1728 = vrot.lane.b32.xlu0 %v1495, 16
        %v1729 = vpop.permute.xlu0 %1728
        %1730 = vrot.lane.b32.xlu0 %v1496, 16
        %v1731 = vpop.permute.xlu0 %1730
        %1732 = vrot.lane.b32.xlu0 %v1497, 16
        %v1733 = vpop.permute.xlu0 %1732
        %1734 = vrot.lane.b32.xlu0 %v1498, 16
        %v1735 = vpop.permute.xlu0 %1734
        %1736 = vrot.lane.b32.xlu0 %v1499, 16
        %v1737 = vpop.permute.xlu0 %1736
        %1738 = vrot.lane.b32.xlu0 %v1500, 16
        %v1739 = vpop.permute.xlu0 %1738
        %1740 = vrot.lane.b32.xlu0 %v1501, 16
        %v1741 = vpop.permute.xlu0 %1740
        %1742 = vrot.lane.b32.xlu0 %v1502, 16
        %v1743 = vpop.permute.xlu0 %1742
        %1744 = vrot.lane.b32.xlu0 %v1503, 16
        %v1745 = vpop.permute.xlu0 %1744
        %1746 = vrot.lane.b32.xlu0 %v1504, 16
        %v1747 = vpop.permute.xlu0 %1746
        %1748 = vrot.lane.b32.xlu0 %v1505, 16
        %v1749 = vpop.permute.xlu0 %1748
        %1750 = vrot.lane.b32.xlu0 %v1506, 16
        %v1751 = vpop.permute.xlu0 %1750
        %1752 = vrot.lane.b32.xlu0 %v1507, 16
        %v1753 = vpop.permute.xlu0 %1752
        %1754 = vrot.lane.b32.xlu0 %v1508, 16
        %v1755 = vpop.permute.xlu0 %1754
        %1756 = vrot.lane.b32.xlu0 %v1509, 16
        %v1757 = vpop.permute.xlu0 %1756
        %1758 = vrot.lane.b32.xlu0 %v1510, 16
        %v1759 = vpop.permute.xlu0 %1758
        %1760 = vrot.lane.b32.xlu0 %v1511, 16
        %v1761 = vpop.permute.xlu0 %1760
        %1762 = vrot.lane.b32.xlu0 %v1512, 16
        %v1763 = vpop.permute.xlu0 %1762
        %1764 = vrot.lane.b32.xlu0 %v1513, 16
        %v1765 = vpop.permute.xlu0 %1764
        %1766 = vrot.lane.b32.xlu0 %v1514, 16
        %v1767 = vpop.permute.xlu0 %1766
        %1768 = vrot.lane.b32.xlu0 %v1515, 16
        %v1769 = vpop.permute.xlu0 %1768
        %1770 = vrot.lane.b32.xlu0 %v1516, 16
        %v1771 = vpop.permute.xlu0 %1770
        %vm1802 = vcmask 195712
        %1803 = vst.msk [vmem:[#allocation3] sm:$0xff] %vm1802, %v1713
        %1804 = vst.msk [vmem:[#allocation3 + $0x8] sm:$0xff] %vm1802, %v1715
        %1805 = vst.msk [vmem:[#allocation3 + $0x10] sm:$0xff] %vm1802, %v1717
        %1806 = vst.msk [vmem:[#allocation3 + $0x18] sm:$0xff] %vm1802, %v1719
        %1807 = vst.msk [vmem:[#allocation3 + $0x20] sm:$0xff] %vm1802, %v1721
        %1808 = vst.msk [vmem:[#allocation3 + $0x28] sm:$0xff] %vm1802, %v1723
        %1809 = vst.msk [vmem:[#allocation3 + $0x30] sm:$0xff] %vm1802, %v1725
        %1810 = vst.msk [vmem:[#allocation3 + $0x38] sm:$0xff] %vm1802, %v1727
        %1811 = vst.msk [vmem:[#allocation3 + $0x40] sm:$0xff] %vm1802, %v1729
        %1812 = vst.msk [vmem:[#allocation3 + $0x48] sm:$0xff] %vm1802, %v1731
        %1813 = vst.msk [vmem:[#allocation3 + $0x50] sm:$0xff] %vm1802, %v1733
        %1814 = vst.msk [vmem:[#allocation3 + $0x58] sm:$0xff] %vm1802, %v1735
        %1815 = vst.msk [vmem:[#allocation3 + $0x60] sm:$0xff] %vm1802, %v1737
        %1816 = vst.msk [vmem:[#allocation3 + $0x68] sm:$0xff] %vm1802, %v1739
        %1817 = vst.msk [vmem:[#allocation3 + $0x70] sm:$0xff] %vm1802, %v1741
        %1818 = vst.msk [vmem:[#allocation3 + $0x78] sm:$0xff] %vm1802, %v1743
        %1819 = vst.msk [vmem:[#allocation3 + $0x80] sm:$0xff] %vm1802, %v1745
        %1820 = vst.msk [vmem:[#allocation3 + $0x88] sm:$0xff] %vm1802, %v1747
        %1821 = vst.msk [vmem:[#allocation3 + $0x90] sm:$0xff] %vm1802, %v1749
        %1822 = vst.msk [vmem:[#allocation3 + $0x98] sm:$0xff] %vm1802, %v1751
        %1823 = vst.msk [vmem:[#allocation3 + $0xa0] sm:$0xff] %vm1802, %v1753
        %1824 = vst.msk [vmem:[#allocation3 + $0xa8] sm:$0xff] %vm1802, %v1755
        %1825 = vst.msk [vmem:[#allocation3 + $0xb0] sm:$0xff] %vm1802, %v1757
        %1826 = vst.msk [vmem:[#allocation3 + $0xb8] sm:$0xff] %vm1802, %v1759
        %1827 = vst.msk [vmem:[#allocation3 + $0xc0] sm:$0xff] %vm1802, %v1761
        %1828 = vst.msk [vmem:[#allocation3 + $0xc8] sm:$0xff] %vm1802, %v1763
        %1829 = vst.msk [vmem:[#allocation3 + $0xd0] sm:$0xff] %vm1802, %v1765
        %1830 = vst.msk [vmem:[#allocation3 + $0xd8] sm:$0xff] %vm1802, %v1767
        %1831 = vst.msk [vmem:[#allocation3 + $0xe0] sm:$0xff] %vm1802, %v1769
        %1832 = vst.msk [vmem:[#allocation3 + $0xe8] sm:$0xff] %vm1802, %v1771
        %s1833 = scalar_lea.vmem [#allocation3], 240
        %1834 = vst.msk [vmem:[%s1833] sm:$0xff] %vm1802, 0.0
        %1835 = vst.msk [vmem:[%s1833 + $0x8] sm:$0xff] %vm1802, 0.0
        %v1836 = vld [vmem:[#allocation3] sm:$0xff]
        %v1837 = vld [vmem:[#allocation3 + $0x8] sm:$0xff]
        %v1838 = vld [vmem:[#allocation3 + $0x10] sm:$0xff]
        %v1839 = vld [vmem:[#allocation3 + $0x18] sm:$0xff]
        %v1840 = vld [vmem:[#allocation3 + $0x20] sm:$0xff]
        %v1841 = vld [vmem:[#allocation3 + $0x28] sm:$0xff]
        %v1842 = vld [vmem:[#allocation3 + $0x30] sm:$0xff]
        %v1843 = vld [vmem:[#allocation3 + $0x38] sm:$0xff]
        %v1844 = vld [vmem:[#allocation3 + $0x40] sm:$0xff]
        %v1845 = vld [vmem:[#allocation3 + $0x48] sm:$0xff]
        %v1846 = vld [vmem:[#allocation3 + $0x50] sm:$0xff]
        %v1847 = vld [vmem:[#allocation3 + $0x58] sm:$0xff]
        %v1848 = vld [vmem:[#allocation3 + $0x60] sm:$0xff]
        %v1849 = vld [vmem:[#allocation3 + $0x68] sm:$0xff]
        %v1850 = vld [vmem:[#allocation3 + $0x70] sm:$0xff]
        %v1851 = vld [vmem:[#allocation3 + $0x78] sm:$0xff]
        %v1852 = vld [vmem:[#allocation3 + $0x80] sm:$0xff]
        %v1853 = vld [vmem:[#allocation3 + $0x88] sm:$0xff]
        %v1854 = vld [vmem:[#allocation3 + $0x90] sm:$0xff]
        %v1855 = vld [vmem:[#allocation3 + $0x98] sm:$0xff]
        %v1856 = vld [vmem:[#allocation3 + $0xa0] sm:$0xff]
        %v1857 = vld [vmem:[#allocation3 + $0xa8] sm:$0xff]
        %v1858 = vld [vmem:[#allocation3 + $0xb0] sm:$0xff]
        %v1859 = vld [vmem:[#allocation3 + $0xb8] sm:$0xff]
        %v1860 = vld [vmem:[#allocation3 + $0xc0] sm:$0xff]
        %v1861 = vld [vmem:[#allocation3 + $0xc8] sm:$0xff]
        %v1862 = vld [vmem:[#allocation3 + $0xd0] sm:$0xff]
        %v1863 = vld [vmem:[#allocation3 + $0xd8] sm:$0xff]
        %v1864 = vld [vmem:[#allocation3 + $0xe0] sm:$0xff]
        %v1865 = vld [vmem:[#allocation3 + $0xe8] sm:$0xff]
        %v1866 = vld [vmem:[#allocation3 + $0xf0] sm:$0xff]
        %v1867 = vld [vmem:[#allocation3 + $0xf8] sm:$0xff]
        %v1868 = vld [vmem:[%s3] sm:$0xff]
        %v1869 = vld [vmem:[%s3 + $0x8] sm:$0xff]
        %v1870 = vld [vmem:[%s3 + $0x10] sm:$0xff]
        %v1871 = vld [vmem:[%s4] sm:$0x1]
        %v1873 = vperm.slane %v1871, 0
        %vm1875 = vcmask 195584
        %v1877 = vsel %vm1875, %v1836, 0
        %v1880 = vsel %vm1875, %v1837, 0
        %v1883 = vsel %vm1875, %v1838, 0
        %v1886 = vsel %vm1875, %v1839, 0
        %v1889 = vsel %vm1875, %v1840, 0
        %v1892 = vsel %vm1875, %v1841, 0
        %v1895 = vsel %vm1875, %v1842, 0
        %v1898 = vsel %vm1875, %v1843, 0
        %v1901 = vsel %vm1875, %v1844, 0
        %v1904 = vsel %vm1875, %v1845, 0
        %v1907 = vsel %vm1875, %v1846, 0
        %v1910 = vsel %vm1875, %v1847, 0
        %v1913 = vsel %vm1875, %v1848, 0
        %v1916 = vsel %vm1875, %v1849, 0
        %v1919 = vsel %vm1875, %v1850, 0
        %v1922 = vsel %vm1875, %v1851, 0
        %v1925 = vsel %vm1875, %v1852, 0
        %v1928 = vsel %vm1875, %v1853, 0
        %v1931 = vsel %vm1875, %v1854, 0
        %v1934 = vsel %vm1875, %v1855, 0
        %v1937 = vsel %vm1875, %v1856, 0
        %v1940 = vsel %vm1875, %v1857, 0
        %v1943 = vsel %vm1875, %v1858, 0
        %v1946 = vsel %vm1875, %v1859, 0
        %v1949 = vsel %vm1875, %v1860, 0
        %v1952 = vsel %vm1875, %v1861, 0
        %v1955 = vsel %vm1875, %v1862, 0
        %v1958 = vsel %vm1875, %v1863, 0
        %v1961 = vsel %vm1875, %v1864, 0
        %v1964 = vsel %vm1875, %v1865, 0
        %v1967 = vsel %vm1875, %v1866, 0
        %v1970 = vsel %vm1875, %v1867, 0
        %1972 = vmatpush.msra.mxu0 0.0
        %1973 = vmatpush.msra.mxu0 0.0
        %1974 = vmatpush.msra.mxu0 0.0
        %1975 = vmatpush.msra.mxu0 0.0
        %1976 = vmatpush.msra.mxu0 0.0
        %1977 = vmatpush.msra.mxu0 0.0
        %1978 = vmatpush.msra.mxu0 0.0
        %1979 = vmatpush.msra.mxu0 0.0
        %1980 = vmatpush.msra.mxu0 0.0
        %1981 = vmatpush.msra.mxu0 0.0
        %1982 = vmatpush.msra.mxu0 0.0
        %1983 = vmatpush.msra.mxu0 0.0
        %1984 = vmatpush.msra.mxu0 0.0
        %1985 = vmatpush.msra.mxu0 %v1870
        %1986 = vmatpush.msra.mxu0 %v1869
        %1987 = vmatpush.msra.mxu0 %v1868
        %1988 = vmatmul.f32.gmra.mxu0 %v1877
        %v1989 = vpop.f32.mrf.mxu0
        %v1990 = vadd.f32 %v1873, %v1989
        %1991 = vmatmul.f32.gmra.mxu0 %v1880
        %v1992 = vpop.f32.mrf.mxu0
        %v1993 = vadd.f32 %v1873, %v1992
        %1994 = vmatmul.f32.gmra.mxu0 %v1883
        %v1995 = vpop.f32.mrf.mxu0
        %v1996 = vadd.f32 %v1873, %v1995
        %1997 = vmatmul.f32.gmra.mxu0 %v1886
        %v1998 = vpop.f32.mrf.mxu0
        %v1999 = vadd.f32 %v1873, %v1998
        %2000 = vmatmul.f32.gmra.mxu0 %v1889
        %v2001 = vpop.f32.mrf.mxu0
        %v2002 = vadd.f32 %v1873, %v2001
        %2003 = vmatmul.f32.gmra.mxu0 %v1892
        %v2004 = vpop.f32.mrf.mxu0
        %v2005 = vadd.f32 %v1873, %v2004
        %2006 = vmatmul.f32.gmra.mxu0 %v1895
        %v2007 = vpop.f32.mrf.mxu0
        %v2008 = vadd.f32 %v1873, %v2007
        %2009 = vmatmul.f32.gmra.mxu0 %v1898
        %v2010 = vpop.f32.mrf.mxu0
        %v2011 = vadd.f32 %v1873, %v2010
        %2012 = vmatmul.f32.gmra.mxu0 %v1901
        %v2013 = vpop.f32.mrf.mxu0
        %v2014 = vadd.f32 %v1873, %v2013
        %2015 = vmatmul.f32.gmra.mxu0 %v1904
        %v2016 = vpop.f32.mrf.mxu0
        %v2017 = vadd.f32 %v1873, %v2016
        %2018 = vmatmul.f32.gmra.mxu0 %v1907
        %v2019 = vpop.f32.mrf.mxu0
        %v2020 = vadd.f32 %v1873, %v2019
        %2021 = vmatmul.f32.gmra.mxu0 %v1910
        %v2022 = vpop.f32.mrf.mxu0
        %v2023 = vadd.f32 %v1873, %v2022
        %2024 = vmatmul.f32.gmra.mxu0 %v1913
        %v2025 = vpop.f32.mrf.mxu0
        %v2026 = vadd.f32 %v1873, %v2025
        %2027 = vmatmul.f32.gmra.mxu0 %v1916
        %v2028 = vpop.f32.mrf.mxu0
        %v2029 = vadd.f32 %v1873, %v2028
        %2030 = vmatmul.f32.gmra.mxu0 %v1919
        %v2031 = vpop.f32.mrf.mxu0
        %v2032 = vadd.f32 %v1873, %v2031
        %2033 = vmatmul.f32.gmra.mxu0 %v1922
        %v2034 = vpop.f32.mrf.mxu0
        %v2035 = vadd.f32 %v1873, %v2034
        %2036 = vmatmul.f32.gmra.mxu0 %v1925
        %v2037 = vpop.f32.mrf.mxu0
        %v2038 = vadd.f32 %v1873, %v2037
        %2039 = vmatmul.f32.gmra.mxu0 %v1928
        %v2040 = vpop.f32.mrf.mxu0
        %v2041 = vadd.f32 %v1873, %v2040
        %2042 = vmatmul.f32.gmra.mxu0 %v1931
        %v2043 = vpop.f32.mrf.mxu0
        %v2044 = vadd.f32 %v1873, %v2043
        %2045 = vmatmul.f32.gmra.mxu0 %v1934
        %v2046 = vpop.f32.mrf.mxu0
        %v2047 = vadd.f32 %v1873, %v2046
        %2048 = vmatmul.f32.gmra.mxu0 %v1937
        %v2049 = vpop.f32.mrf.mxu0
        %v2050 = vadd.f32 %v1873, %v2049
        %2051 = vmatmul.f32.gmra.mxu0 %v1940
        %v2052 = vpop.f32.mrf.mxu0
        %v2053 = vadd.f32 %v1873, %v2052
        %2054 = vmatmul.f32.gmra.mxu0 %v1943
        %v2055 = vpop.f32.mrf.mxu0
        %v2056 = vadd.f32 %v1873, %v2055
        %2057 = vmatmul.f32.gmra.mxu0 %v1946
        %v2058 = vpop.f32.mrf.mxu0
        %v2059 = vadd.f32 %v1873, %v2058
        %2060 = vmatmul.f32.gmra.mxu0 %v1949
        %v2061 = vpop.f32.mrf.mxu0
        %v2062 = vadd.f32 %v1873, %v2061
        %2063 = vmatmul.f32.gmra.mxu0 %v1952
        %v2064 = vpop.f32.mrf.mxu0
        %v2065 = vadd.f32 %v1873, %v2064
        %2066 = vmatmul.f32.gmra.mxu0 %v1955
        %v2067 = vpop.f32.mrf.mxu0
        %v2068 = vadd.f32 %v1873, %v2067
        %2069 = vmatmul.f32.gmra.mxu0 %v1958
        %v2070 = vpop.f32.mrf.mxu0
        %v2071 = vadd.f32 %v1873, %v2070
        %2072 = vmatmul.f32.gmra.mxu0 %v1961
        %v2073 = vpop.f32.mrf.mxu0
        %v2074 = vadd.f32 %v1873, %v2073
        %2075 = vmatmul.f32.gmra.mxu0 %v1964
        %v2076 = vpop.f32.mrf.mxu0
        %v2077 = vadd.f32 %v1873, %v2076
        %2078 = vmatmul.f32.gmra.mxu0 %v1967
        %v2079 = vpop.f32.mrf.mxu0
        %v2080 = vadd.f32 %v1873, %v2079
        %2081 = vmatmul.f32.gmra.mxu0 %v1970
        %v2082 = vpop.f32.mrf.mxu0
        %v2083 = vadd.f32 %v1873, %v2082
        %2084 = vdwg.mxu0
        %v2085 = vxor.u32 %v1990, 2147483648
        %v2086 = vxor.u32 %v1993, 2147483648
        %v2087 = vxor.u32 %v1996, 2147483648
        %v2088 = vxor.u32 %v1999, 2147483648
        %v2089 = vxor.u32 %v2002, 2147483648
        %v2090 = vxor.u32 %v2005, 2147483648
        %v2091 = vxor.u32 %v2008, 2147483648
        %v2092 = vxor.u32 %v2011, 2147483648
        %v2093 = vxor.u32 %v2014, 2147483648
        %v2094 = vxor.u32 %v2017, 2147483648
        %v2095 = vxor.u32 %v2020, 2147483648
        %v2096 = vxor.u32 %v2023, 2147483648
        %v2097 = vxor.u32 %v2026, 2147483648
        %v2098 = vxor.u32 %v2029, 2147483648
        %v2099 = vxor.u32 %v2032, 2147483648
        %v2100 = vxor.u32 %v2035, 2147483648
        %v2101 = vxor.u32 %v2038, 2147483648
        %v2102 = vxor.u32 %v2041, 2147483648
        %v2103 = vxor.u32 %v2044, 2147483648
        %v2104 = vxor.u32 %v2047, 2147483648
        %v2105 = vxor.u32 %v2050, 2147483648
        %v2106 = vxor.u32 %v2053, 2147483648
        %v2107 = vxor.u32 %v2056, 2147483648
        %v2108 = vxor.u32 %v2059, 2147483648
        %v2109 = vxor.u32 %v2062, 2147483648
        %v2110 = vxor.u32 %v2065, 2147483648
        %v2111 = vxor.u32 %v2068, 2147483648
        %v2112 = vxor.u32 %v2071, 2147483648
        %v2113 = vxor.u32 %v2074, 2147483648
        %v2114 = vxor.u32 %v2077, 2147483648
        %v2115 = vxor.u32 %v2080, 2147483648
        %v2116 = vxor.u32 %v2083, 2147483648
        %v2117 = vmul.f32 %v2085, 1.442695
        %v2118 = vpow.pop %v2117
        %v2119 = vmul.f32 %v2086, 1.442695
        %v2120 = vpow.pop %v2119
        %v2121 = vmul.f32 %v2087, 1.442695
        %v2122 = vpow.pop %v2121
        %v2123 = vmul.f32 %v2088, 1.442695
        %v2124 = vpow.pop %v2123
        %v2125 = vmul.f32 %v2089, 1.442695
        %v2126 = vpow.pop %v2125
        %v2127 = vmul.f32 %v2090, 1.442695
        %v2128 = vpow.pop %v2127
        %v2129 = vmul.f32 %v2091, 1.442695
        %v2130 = vpow.pop %v2129
        %v2131 = vmul.f32 %v2092, 1.442695
        %v2132 = vpow.pop %v2131
        %v2133 = vmul.f32 %v2093, 1.442695
        %v2134 = vpow.pop %v2133
        %v2135 = vmul.f32 %v2094, 1.442695
        %v2136 = vpow.pop %v2135
        %v2137 = vmul.f32 %v2095, 1.442695
        %v2138 = vpow.pop %v2137
        %v2139 = vmul.f32 %v2096, 1.442695
        %v2140 = vpow.pop %v2139
        %v2141 = vmul.f32 %v2097, 1.442695
        %v2142 = vpow.pop %v2141
        %v2143 = vmul.f32 %v2098, 1.442695
        %v2144 = vpow.pop %v2143
        %v2145 = vmul.f32 %v2099, 1.442695
        %v2146 = vpow.pop %v2145
        %v2147 = vmul.f32 %v2100, 1.442695
        %v2148 = vpow.pop %v2147
        %v2149 = vmul.f32 %v2101, 1.442695
        %v2150 = vpow.pop %v2149
        %v2151 = vmul.f32 %v2102, 1.442695
        %v2152 = vpow.pop %v2151
        %v2153 = vmul.f32 %v2103, 1.442695
        %v2154 = vpow.pop %v2153
        %v2155 = vmul.f32 %v2104, 1.442695
        %v2156 = vpow.pop %v2155
        %v2157 = vmul.f32 %v2105, 1.442695
        %v2158 = vpow.pop %v2157
        %v2159 = vmul.f32 %v2106, 1.442695
        %v2160 = vpow.pop %v2159
        %v2161 = vmul.f32 %v2107, 1.442695
        %v2162 = vpow.pop %v2161
        %v2163 = vmul.f32 %v2108, 1.442695
        %v2164 = vpow.pop %v2163
        %v2165 = vmul.f32 %v2109, 1.442695
        %v2166 = vpow.pop %v2165
        %v2167 = vmul.f32 %v2110, 1.442695
        %v2168 = vpow.pop %v2167
        %v2169 = vmul.f32 %v2111, 1.442695
        %v2170 = vpow.pop %v2169
        %v2171 = vmul.f32 %v2112, 1.442695
        %v2172 = vpow.pop %v2171
        %v2173 = vmul.f32 %v2113, 1.442695
        %v2174 = vpow.pop %v2173
        %v2175 = vmul.f32 %v2114, 1.442695
        %v2176 = vpow.pop %v2175
        %v2177 = vmul.f32 %v2115, 1.442695
        %v2178 = vpow.pop %v2177
        %v2179 = vmul.f32 %v2116, 1.442695
        %v2180 = vpow.pop %v2179
        %v2181 = vadd.f32 %v2118, 1.0
        %v2182 = vadd.f32 %v2120, 1.0
        %v2183 = vadd.f32 %v2122, 1.0
        %v2184 = vadd.f32 %v2124, 1.0
        %v2185 = vadd.f32 %v2126, 1.0
        %v2186 = vadd.f32 %v2128, 1.0
        %v2187 = vadd.f32 %v2130, 1.0
        %v2188 = vadd.f32 %v2132, 1.0
        %v2189 = vadd.f32 %v2134, 1.0
        %v2190 = vadd.f32 %v2136, 1.0
        %v2191 = vadd.f32 %v2138, 1.0
        %v2192 = vadd.f32 %v2140, 1.0
        %v2193 = vadd.f32 %v2142, 1.0
        %v2194 = vadd.f32 %v2144, 1.0
        %v2195 = vadd.f32 %v2146, 1.0
        %v2196 = vadd.f32 %v2148, 1.0
        %v2197 = vadd.f32 %v2150, 1.0
        %v2198 = vadd.f32 %v2152, 1.0
        %v2199 = vadd.f32 %v2154, 1.0
        %v2200 = vadd.f32 %v2156, 1.0
        %v2201 = vadd.f32 %v2158, 1.0
        %v2202 = vadd.f32 %v2160, 1.0
        %v2203 = vadd.f32 %v2162, 1.0
        %v2204 = vadd.f32 %v2164, 1.0
        %v2205 = vadd.f32 %v2166, 1.0
        %v2206 = vadd.f32 %v2168, 1.0
        %v2207 = vadd.f32 %v2170, 1.0
        %v2208 = vadd.f32 %v2172, 1.0
        %v2209 = vadd.f32 %v2174, 1.0
        %v2210 = vadd.f32 %v2176, 1.0
        %v2211 = vadd.f32 %v2178, 1.0
        %v2212 = vadd.f32 %v2180, 1.0
        %v2213 = vrcp.pop %v2181
        %v2214 = vmul.f32 %v2181, %v2213
        %v2215 = vsub.f32 1.0, %v2214
        %v2216 = vmul.f32 %v2213, %v2215
        %v2217 = vadd.f32 %v2213, %v2216
        %vm2218 = vweird.f32 %v2181
        %vm2219 = vweird.f32 %v2213
        %vm2220 = vmor %vm2218, %vm2219
        %v2221 = vsel %vm2220, %v2213, %v2217
        %v2222 = vand.u32 2147483647, %v2181
        %vm2223 = vcmp.eq.f32.partialorder %v2222, 8.507059e+37
        %v2224 = vand.u32 %v2181, 2147483648
        %v2225 = vor.u32 1.1754944e-38, %v2224
        %v2226 = vsel %vm2223, %v2225, %v2221
        %v2227 = vmul.f32 1.0, %v2226
        %v2228 = vrcp.pop %v2182
        %v2229 = vmul.f32 %v2182, %v2228
        %v2230 = vsub.f32 1.0, %v2229
        %v2231 = vmul.f32 %v2228, %v2230
        %v2232 = vadd.f32 %v2228, %v2231
        %vm2233 = vweird.f32 %v2182
        %vm2234 = vweird.f32 %v2228
        %vm2235 = vmor %vm2233, %vm2234
        %v2236 = vsel %vm2235, %v2228, %v2232
        %v2237 = vand.u32 2147483647, %v2182
        %vm2238 = vcmp.eq.f32.partialorder %v2237, 8.507059e+37
        %v2239 = vand.u32 %v2182, 2147483648
        %v2240 = vor.u32 1.1754944e-38, %v2239
        %v2241 = vsel %vm2238, %v2240, %v2236
        %v2242 = vmul.f32 1.0, %v2241
        %v2243 = vrcp.pop %v2183
        %v2244 = vmul.f32 %v2183, %v2243
        %v2245 = vsub.f32 1.0, %v2244
        %v2246 = vmul.f32 %v2243, %v2245
        %v2247 = vadd.f32 %v2243, %v2246
        %vm2248 = vweird.f32 %v2183
        %vm2249 = vweird.f32 %v2243
        %vm2250 = vmor %vm2248, %vm2249
        %v2251 = vsel %vm2250, %v2243, %v2247
        %v2252 = vand.u32 2147483647, %v2183
        %vm2253 = vcmp.eq.f32.partialorder %v2252, 8.507059e+37
        %v2254 = vand.u32 %v2183, 2147483648
        %v2255 = vor.u32 1.1754944e-38, %v2254
        %v2256 = vsel %vm2253, %v2255, %v2251
        %v2257 = vmul.f32 1.0, %v2256
        %v2258 = vrcp.pop %v2184
        %v2259 = vmul.f32 %v2184, %v2258
        %v2260 = vsub.f32 1.0, %v2259
        %v2261 = vmul.f32 %v2258, %v2260
        %v2262 = vadd.f32 %v2258, %v2261
        %vm2263 = vweird.f32 %v2184
        %vm2264 = vweird.f32 %v2258
        %vm2265 = vmor %vm2263, %vm2264
        %v2266 = vsel %vm2265, %v2258, %v2262
        %v2267 = vand.u32 2147483647, %v2184
        %vm2268 = vcmp.eq.f32.partialorder %v2267, 8.507059e+37
        %v2269 = vand.u32 %v2184, 2147483648
        %v2270 = vor.u32 1.1754944e-38, %v2269
        %v2271 = vsel %vm2268, %v2270, %v2266
        %v2272 = vmul.f32 1.0, %v2271
        %v2273 = vrcp.pop %v2185
        %v2274 = vmul.f32 %v2185, %v2273
        %v2275 = vsub.f32 1.0, %v2274
        %v2276 = vmul.f32 %v2273, %v2275
        %v2277 = vadd.f32 %v2273, %v2276
        %vm2278 = vweird.f32 %v2185
        %vm2279 = vweird.f32 %v2273
        %vm2280 = vmor %vm2278, %vm2279
        %v2281 = vsel %vm2280, %v2273, %v2277
        %v2282 = vand.u32 2147483647, %v2185
        %vm2283 = vcmp.eq.f32.partialorder %v2282, 8.507059e+37
        %v2284 = vand.u32 %v2185, 2147483648
        %v2285 = vor.u32 1.1754944e-38, %v2284
        %v2286 = vsel %vm2283, %v2285, %v2281
        %v2287 = vmul.f32 1.0, %v2286
        %v2288 = vrcp.pop %v2186
        %v2289 = vmul.f32 %v2186, %v2288
        %v2290 = vsub.f32 1.0, %v2289
        %v2291 = vmul.f32 %v2288, %v2290
        %v2292 = vadd.f32 %v2288, %v2291
        %vm2293 = vweird.f32 %v2186
        %vm2294 = vweird.f32 %v2288
        %vm2295 = vmor %vm2293, %vm2294
        %v2296 = vsel %vm2295, %v2288, %v2292
        %v2297 = vand.u32 2147483647, %v2186
        %vm2298 = vcmp.eq.f32.partialorder %v2297, 8.507059e+37
        %v2299 = vand.u32 %v2186, 2147483648
        %v2300 = vor.u32 1.1754944e-38, %v2299
        %v2301 = vsel %vm2298, %v2300, %v2296
        %v2302 = vmul.f32 1.0, %v2301
        %v2303 = vrcp.pop %v2187
        %v2304 = vmul.f32 %v2187, %v2303
        %v2305 = vsub.f32 1.0, %v2304
        %v2306 = vmul.f32 %v2303, %v2305
        %v2307 = vadd.f32 %v2303, %v2306
        %vm2308 = vweird.f32 %v2187
        %vm2309 = vweird.f32 %v2303
        %vm2310 = vmor %vm2308, %vm2309
        %v2311 = vsel %vm2310, %v2303, %v2307
        %v2312 = vand.u32 2147483647, %v2187
        %vm2313 = vcmp.eq.f32.partialorder %v2312, 8.507059e+37
        %v2314 = vand.u32 %v2187, 2147483648
        %v2315 = vor.u32 1.1754944e-38, %v2314
        %v2316 = vsel %vm2313, %v2315, %v2311
        %v2317 = vmul.f32 1.0, %v2316
        %v2318 = vrcp.pop %v2188
        %v2319 = vmul.f32 %v2188, %v2318
        %v2320 = vsub.f32 1.0, %v2319
        %v2321 = vmul.f32 %v2318, %v2320
        %v2322 = vadd.f32 %v2318, %v2321
        %vm2323 = vweird.f32 %v2188
        %vm2324 = vweird.f32 %v2318
        %vm2325 = vmor %vm2323, %vm2324
        %v2326 = vsel %vm2325, %v2318, %v2322
        %v2327 = vand.u32 2147483647, %v2188
        %vm2328 = vcmp.eq.f32.partialorder %v2327, 8.507059e+37
        %v2329 = vand.u32 %v2188, 2147483648
        %v2330 = vor.u32 1.1754944e-38, %v2329
        %v2331 = vsel %vm2328, %v2330, %v2326
        %v2332 = vmul.f32 1.0, %v2331
        %v2333 = vrcp.pop %v2189
        %v2334 = vmul.f32 %v2189, %v2333
        %v2335 = vsub.f32 1.0, %v2334
        %v2336 = vmul.f32 %v2333, %v2335
        %v2337 = vadd.f32 %v2333, %v2336
        %vm2338 = vweird.f32 %v2189
        %vm2339 = vweird.f32 %v2333
        %vm2340 = vmor %vm2338, %vm2339
        %v2341 = vsel %vm2340, %v2333, %v2337
        %v2342 = vand.u32 2147483647, %v2189
        %vm2343 = vcmp.eq.f32.partialorder %v2342, 8.507059e+37
        %v2344 = vand.u32 %v2189, 2147483648
        %v2345 = vor.u32 1.1754944e-38, %v2344
        %v2346 = vsel %vm2343, %v2345, %v2341
        %v2347 = vmul.f32 1.0, %v2346
        %v2348 = vrcp.pop %v2190
        %v2349 = vmul.f32 %v2190, %v2348
        %v2350 = vsub.f32 1.0, %v2349
        %v2351 = vmul.f32 %v2348, %v2350
        %v2352 = vadd.f32 %v2348, %v2351
        %vm2353 = vweird.f32 %v2190
        %vm2354 = vweird.f32 %v2348
        %vm2355 = vmor %vm2353, %vm2354
        %v2356 = vsel %vm2355, %v2348, %v2352
        %v2357 = vand.u32 2147483647, %v2190
        %vm2358 = vcmp.eq.f32.partialorder %v2357, 8.507059e+37
        %v2359 = vand.u32 %v2190, 2147483648
        %v2360 = vor.u32 1.1754944e-38, %v2359
        %v2361 = vsel %vm2358, %v2360, %v2356
        %v2362 = vmul.f32 1.0, %v2361
        %v2363 = vrcp.pop %v2191
        %v2364 = vmul.f32 %v2191, %v2363
        %v2365 = vsub.f32 1.0, %v2364
        %v2366 = vmul.f32 %v2363, %v2365
        %v2367 = vadd.f32 %v2363, %v2366
        %vm2368 = vweird.f32 %v2191
        %vm2369 = vweird.f32 %v2363
        %vm2370 = vmor %vm2368, %vm2369
        %v2371 = vsel %vm2370, %v2363, %v2367
        %v2372 = vand.u32 2147483647, %v2191
        %vm2373 = vcmp.eq.f32.partialorder %v2372, 8.507059e+37
        %v2374 = vand.u32 %v2191, 2147483648
        %v2375 = vor.u32 1.1754944e-38, %v2374
        %v2376 = vsel %vm2373, %v2375, %v2371
        %v2377 = vmul.f32 1.0, %v2376
        %v2378 = vrcp.pop %v2192
        %v2379 = vmul.f32 %v2192, %v2378
        %v2380 = vsub.f32 1.0, %v2379
        %v2381 = vmul.f32 %v2378, %v2380
        %v2382 = vadd.f32 %v2378, %v2381
        %vm2383 = vweird.f32 %v2192
        %vm2384 = vweird.f32 %v2378
        %vm2385 = vmor %vm2383, %vm2384
        %v2386 = vsel %vm2385, %v2378, %v2382
        %v2387 = vand.u32 2147483647, %v2192
        %vm2388 = vcmp.eq.f32.partialorder %v2387, 8.507059e+37
        %v2389 = vand.u32 %v2192, 2147483648
        %v2390 = vor.u32 1.1754944e-38, %v2389
        %v2391 = vsel %vm2388, %v2390, %v2386
        %v2392 = vmul.f32 1.0, %v2391
        %v2393 = vrcp.pop %v2193
        %v2394 = vmul.f32 %v2193, %v2393
        %v2395 = vsub.f32 1.0, %v2394
        %v2396 = vmul.f32 %v2393, %v2395
        %v2397 = vadd.f32 %v2393, %v2396
        %vm2398 = vweird.f32 %v2193
        %vm2399 = vweird.f32 %v2393
        %vm2400 = vmor %vm2398, %vm2399
        %v2401 = vsel %vm2400, %v2393, %v2397
        %v2402 = vand.u32 2147483647, %v2193
        %vm2403 = vcmp.eq.f32.partialorder %v2402, 8.507059e+37
        %v2404 = vand.u32 %v2193, 2147483648
        %v2405 = vor.u32 1.1754944e-38, %v2404
        %v2406 = vsel %vm2403, %v2405, %v2401
        %v2407 = vmul.f32 1.0, %v2406
        %v2408 = vrcp.pop %v2194
        %v2409 = vmul.f32 %v2194, %v2408
        %v2410 = vsub.f32 1.0, %v2409
        %v2411 = vmul.f32 %v2408, %v2410
        %v2412 = vadd.f32 %v2408, %v2411
        %vm2413 = vweird.f32 %v2194
        %vm2414 = vweird.f32 %v2408
        %vm2415 = vmor %vm2413, %vm2414
        %v2416 = vsel %vm2415, %v2408, %v2412
        %v2417 = vand.u32 2147483647, %v2194
        %vm2418 = vcmp.eq.f32.partialorder %v2417, 8.507059e+37
        %v2419 = vand.u32 %v2194, 2147483648
        %v2420 = vor.u32 1.1754944e-38, %v2419
        %v2421 = vsel %vm2418, %v2420, %v2416
        %v2422 = vmul.f32 1.0, %v2421
        %v2423 = vrcp.pop %v2195
        %v2424 = vmul.f32 %v2195, %v2423
        %v2425 = vsub.f32 1.0, %v2424
        %v2426 = vmul.f32 %v2423, %v2425
        %v2427 = vadd.f32 %v2423, %v2426
        %vm2428 = vweird.f32 %v2195
        %vm2429 = vweird.f32 %v2423
        %vm2430 = vmor %vm2428, %vm2429
        %v2431 = vsel %vm2430, %v2423, %v2427
        %v2432 = vand.u32 2147483647, %v2195
        %vm2433 = vcmp.eq.f32.partialorder %v2432, 8.507059e+37
        %v2434 = vand.u32 %v2195, 2147483648
        %v2435 = vor.u32 1.1754944e-38, %v2434
        %v2436 = vsel %vm2433, %v2435, %v2431
        %v2437 = vmul.f32 1.0, %v2436
        %v2438 = vrcp.pop %v2196
        %v2439 = vmul.f32 %v2196, %v2438
        %v2440 = vsub.f32 1.0, %v2439
        %v2441 = vmul.f32 %v2438, %v2440
        %v2442 = vadd.f32 %v2438, %v2441
        %vm2443 = vweird.f32 %v2196
        %vm2444 = vweird.f32 %v2438
        %vm2445 = vmor %vm2443, %vm2444
        %v2446 = vsel %vm2445, %v2438, %v2442
        %v2447 = vand.u32 2147483647, %v2196
        %vm2448 = vcmp.eq.f32.partialorder %v2447, 8.507059e+37
        %v2449 = vand.u32 %v2196, 2147483648
        %v2450 = vor.u32 1.1754944e-38, %v2449
        %v2451 = vsel %vm2448, %v2450, %v2446
        %v2452 = vmul.f32 1.0, %v2451
        %v2453 = vrcp.pop %v2197
        %v2454 = vmul.f32 %v2197, %v2453
        %v2455 = vsub.f32 1.0, %v2454
        %v2456 = vmul.f32 %v2453, %v2455
        %v2457 = vadd.f32 %v2453, %v2456
        %vm2458 = vweird.f32 %v2197
        %vm2459 = vweird.f32 %v2453
        %vm2460 = vmor %vm2458, %vm2459
        %v2461 = vsel %vm2460, %v2453, %v2457
        %v2462 = vand.u32 2147483647, %v2197
        %vm2463 = vcmp.eq.f32.partialorder %v2462, 8.507059e+37
        %v2464 = vand.u32 %v2197, 2147483648
        %v2465 = vor.u32 1.1754944e-38, %v2464
        %v2466 = vsel %vm2463, %v2465, %v2461
        %v2467 = vmul.f32 1.0, %v2466
        %v2468 = vrcp.pop %v2198
        %v2469 = vmul.f32 %v2198, %v2468
        %v2470 = vsub.f32 1.0, %v2469
        %v2471 = vmul.f32 %v2468, %v2470
        %v2472 = vadd.f32 %v2468, %v2471
        %vm2473 = vweird.f32 %v2198
        %vm2474 = vweird.f32 %v2468
        %vm2475 = vmor %vm2473, %vm2474
        %v2476 = vsel %vm2475, %v2468, %v2472
        %v2477 = vand.u32 2147483647, %v2198
        %vm2478 = vcmp.eq.f32.partialorder %v2477, 8.507059e+37
        %v2479 = vand.u32 %v2198, 2147483648
        %v2480 = vor.u32 1.1754944e-38, %v2479
        %v2481 = vsel %vm2478, %v2480, %v2476
        %v2482 = vmul.f32 1.0, %v2481
        %v2483 = vrcp.pop %v2199
        %v2484 = vmul.f32 %v2199, %v2483
        %v2485 = vsub.f32 1.0, %v2484
        %v2486 = vmul.f32 %v2483, %v2485
        %v2487 = vadd.f32 %v2483, %v2486
        %vm2488 = vweird.f32 %v2199
        %vm2489 = vweird.f32 %v2483
        %vm2490 = vmor %vm2488, %vm2489
        %v2491 = vsel %vm2490, %v2483, %v2487
        %v2492 = vand.u32 2147483647, %v2199
        %vm2493 = vcmp.eq.f32.partialorder %v2492, 8.507059e+37
        %v2494 = vand.u32 %v2199, 2147483648
        %v2495 = vor.u32 1.1754944e-38, %v2494
        %v2496 = vsel %vm2493, %v2495, %v2491
        %v2497 = vmul.f32 1.0, %v2496
        %v2498 = vrcp.pop %v2200
        %v2499 = vmul.f32 %v2200, %v2498
        %v2500 = vsub.f32 1.0, %v2499
        %v2501 = vmul.f32 %v2498, %v2500
        %v2502 = vadd.f32 %v2498, %v2501
        %vm2503 = vweird.f32 %v2200
        %vm2504 = vweird.f32 %v2498
        %vm2505 = vmor %vm2503, %vm2504
        %v2506 = vsel %vm2505, %v2498, %v2502
        %v2507 = vand.u32 2147483647, %v2200
        %vm2508 = vcmp.eq.f32.partialorder %v2507, 8.507059e+37
        %v2509 = vand.u32 %v2200, 2147483648
        %v2510 = vor.u32 1.1754944e-38, %v2509
        %v2511 = vsel %vm2508, %v2510, %v2506
        %v2512 = vmul.f32 1.0, %v2511
        %v2513 = vrcp.pop %v2201
        %v2514 = vmul.f32 %v2201, %v2513
        %v2515 = vsub.f32 1.0, %v2514
        %v2516 = vmul.f32 %v2513, %v2515
        %v2517 = vadd.f32 %v2513, %v2516
        %vm2518 = vweird.f32 %v2201
        %vm2519 = vweird.f32 %v2513
        %vm2520 = vmor %vm2518, %vm2519
        %v2521 = vsel %vm2520, %v2513, %v2517
        %v2522 = vand.u32 2147483647, %v2201
        %vm2523 = vcmp.eq.f32.partialorder %v2522, 8.507059e+37
        %v2524 = vand.u32 %v2201, 2147483648
        %v2525 = vor.u32 1.1754944e-38, %v2524
        %v2526 = vsel %vm2523, %v2525, %v2521
        %v2527 = vmul.f32 1.0, %v2526
        %v2528 = vrcp.pop %v2202
        %v2529 = vmul.f32 %v2202, %v2528
        %v2530 = vsub.f32 1.0, %v2529
        %v2531 = vmul.f32 %v2528, %v2530
        %v2532 = vadd.f32 %v2528, %v2531
        %vm2533 = vweird.f32 %v2202
        %vm2534 = vweird.f32 %v2528
        %vm2535 = vmor %vm2533, %vm2534
        %v2536 = vsel %vm2535, %v2528, %v2532
        %v2537 = vand.u32 2147483647, %v2202
        %vm2538 = vcmp.eq.f32.partialorder %v2537, 8.507059e+37
        %v2539 = vand.u32 %v2202, 2147483648
        %v2540 = vor.u32 1.1754944e-38, %v2539
        %v2541 = vsel %vm2538, %v2540, %v2536
        %v2542 = vmul.f32 1.0, %v2541
        %v2543 = vrcp.pop %v2203
        %v2544 = vmul.f32 %v2203, %v2543
        %v2545 = vsub.f32 1.0, %v2544
        %v2546 = vmul.f32 %v2543, %v2545
        %v2547 = vadd.f32 %v2543, %v2546
        %vm2548 = vweird.f32 %v2203
        %vm2549 = vweird.f32 %v2543
        %vm2550 = vmor %vm2548, %vm2549
        %v2551 = vsel %vm2550, %v2543, %v2547
        %v2552 = vand.u32 2147483647, %v2203
        %vm2553 = vcmp.eq.f32.partialorder %v2552, 8.507059e+37
        %v2554 = vand.u32 %v2203, 2147483648
        %v2555 = vor.u32 1.1754944e-38, %v2554
        %v2556 = vsel %vm2553, %v2555, %v2551
        %v2557 = vmul.f32 1.0, %v2556
        %v2558 = vrcp.pop %v2204
        %v2559 = vmul.f32 %v2204, %v2558
        %v2560 = vsub.f32 1.0, %v2559
        %v2561 = vmul.f32 %v2558, %v2560
        %v2562 = vadd.f32 %v2558, %v2561
        %vm2563 = vweird.f32 %v2204
        %vm2564 = vweird.f32 %v2558
        %vm2565 = vmor %vm2563, %vm2564
        %v2566 = vsel %vm2565, %v2558, %v2562
        %v2567 = vand.u32 2147483647, %v2204
        %vm2568 = vcmp.eq.f32.partialorder %v2567, 8.507059e+37
        %v2569 = vand.u32 %v2204, 2147483648
        %v2570 = vor.u32 1.1754944e-38, %v2569
        %v2571 = vsel %vm2568, %v2570, %v2566
        %v2572 = vmul.f32 1.0, %v2571
        %v2573 = vrcp.pop %v2205
        %v2574 = vmul.f32 %v2205, %v2573
        %v2575 = vsub.f32 1.0, %v2574
        %v2576 = vmul.f32 %v2573, %v2575
        %v2577 = vadd.f32 %v2573, %v2576
        %vm2578 = vweird.f32 %v2205
        %vm2579 = vweird.f32 %v2573
        %vm2580 = vmor %vm2578, %vm2579
        %v2581 = vsel %vm2580, %v2573, %v2577
        %v2582 = vand.u32 2147483647, %v2205
        %vm2583 = vcmp.eq.f32.partialorder %v2582, 8.507059e+37
        %v2584 = vand.u32 %v2205, 2147483648
        %v2585 = vor.u32 1.1754944e-38, %v2584
        %v2586 = vsel %vm2583, %v2585, %v2581
        %v2587 = vmul.f32 1.0, %v2586
        %v2588 = vrcp.pop %v2206
        %v2589 = vmul.f32 %v2206, %v2588
        %v2590 = vsub.f32 1.0, %v2589
        %v2591 = vmul.f32 %v2588, %v2590
        %v2592 = vadd.f32 %v2588, %v2591
        %vm2593 = vweird.f32 %v2206
        %vm2594 = vweird.f32 %v2588
        %vm2595 = vmor %vm2593, %vm2594
        %v2596 = vsel %vm2595, %v2588, %v2592
        %v2597 = vand.u32 2147483647, %v2206
        %vm2598 = vcmp.eq.f32.partialorder %v2597, 8.507059e+37
        %v2599 = vand.u32 %v2206, 2147483648
        %v2600 = vor.u32 1.1754944e-38, %v2599
        %v2601 = vsel %vm2598, %v2600, %v2596
        %v2602 = vmul.f32 1.0, %v2601
        %v2603 = vrcp.pop %v2207
        %v2604 = vmul.f32 %v2207, %v2603
        %v2605 = vsub.f32 1.0, %v2604
        %v2606 = vmul.f32 %v2603, %v2605
        %v2607 = vadd.f32 %v2603, %v2606
        %vm2608 = vweird.f32 %v2207
        %vm2609 = vweird.f32 %v2603
        %vm2610 = vmor %vm2608, %vm2609
        %v2611 = vsel %vm2610, %v2603, %v2607
        %v2612 = vand.u32 2147483647, %v2207
        %vm2613 = vcmp.eq.f32.partialorder %v2612, 8.507059e+37
        %v2614 = vand.u32 %v2207, 2147483648
        %v2615 = vor.u32 1.1754944e-38, %v2614
        %v2616 = vsel %vm2613, %v2615, %v2611
        %v2617 = vmul.f32 1.0, %v2616
        %v2618 = vrcp.pop %v2208
        %v2619 = vmul.f32 %v2208, %v2618
        %v2620 = vsub.f32 1.0, %v2619
        %v2621 = vmul.f32 %v2618, %v2620
        %v2622 = vadd.f32 %v2618, %v2621
        %vm2623 = vweird.f32 %v2208
        %vm2624 = vweird.f32 %v2618
        %vm2625 = vmor %vm2623, %vm2624
        %v2626 = vsel %vm2625, %v2618, %v2622
        %v2627 = vand.u32 2147483647, %v2208
        %vm2628 = vcmp.eq.f32.partialorder %v2627, 8.507059e+37
        %v2629 = vand.u32 %v2208, 2147483648
        %v2630 = vor.u32 1.1754944e-38, %v2629
        %v2631 = vsel %vm2628, %v2630, %v2626
        %v2632 = vmul.f32 1.0, %v2631
        %v2633 = vrcp.pop %v2209
        %v2634 = vmul.f32 %v2209, %v2633
        %v2635 = vsub.f32 1.0, %v2634
        %v2636 = vmul.f32 %v2633, %v2635
        %v2637 = vadd.f32 %v2633, %v2636
        %vm2638 = vweird.f32 %v2209
        %vm2639 = vweird.f32 %v2633
        %vm2640 = vmor %vm2638, %vm2639
        %v2641 = vsel %vm2640, %v2633, %v2637
        %v2642 = vand.u32 2147483647, %v2209
        %vm2643 = vcmp.eq.f32.partialorder %v2642, 8.507059e+37
        %v2644 = vand.u32 %v2209, 2147483648
        %v2645 = vor.u32 1.1754944e-38, %v2644
        %v2646 = vsel %vm2643, %v2645, %v2641
        %v2647 = vmul.f32 1.0, %v2646
        %v2648 = vrcp.pop %v2210
        %v2649 = vmul.f32 %v2210, %v2648
        %v2650 = vsub.f32 1.0, %v2649
        %v2651 = vmul.f32 %v2648, %v2650
        %v2652 = vadd.f32 %v2648, %v2651
        %vm2653 = vweird.f32 %v2210
        %vm2654 = vweird.f32 %v2648
        %vm2655 = vmor %vm2653, %vm2654
        %v2656 = vsel %vm2655, %v2648, %v2652
        %v2657 = vand.u32 2147483647, %v2210
        %vm2658 = vcmp.eq.f32.partialorder %v2657, 8.507059e+37
        %v2659 = vand.u32 %v2210, 2147483648
        %v2660 = vor.u32 1.1754944e-38, %v2659
        %v2661 = vsel %vm2658, %v2660, %v2656
        %v2662 = vmul.f32 1.0, %v2661
        %v2663 = vrcp.pop %v2211
        %v2664 = vmul.f32 %v2211, %v2663
        %v2665 = vsub.f32 1.0, %v2664
        %v2666 = vmul.f32 %v2663, %v2665
        %v2667 = vadd.f32 %v2663, %v2666
        %vm2668 = vweird.f32 %v2211
        %vm2669 = vweird.f32 %v2663
        %vm2670 = vmor %vm2668, %vm2669
        %v2671 = vsel %vm2670, %v2663, %v2667
        %v2672 = vand.u32 2147483647, %v2211
        %vm2673 = vcmp.eq.f32.partialorder %v2672, 8.507059e+37
        %v2674 = vand.u32 %v2211, 2147483648
        %v2675 = vor.u32 1.1754944e-38, %v2674
        %v2676 = vsel %vm2673, %v2675, %v2671
        %v2677 = vmul.f32 1.0, %v2676
        %v2678 = vrcp.pop %v2212
        %v2679 = vmul.f32 %v2212, %v2678
        %v2680 = vsub.f32 1.0, %v2679
        %v2681 = vmul.f32 %v2678, %v2680
        %v2682 = vadd.f32 %v2678, %v2681
        %vm2683 = vweird.f32 %v2212
        %vm2684 = vweird.f32 %v2678
        %vm2685 = vmor %vm2683, %vm2684
        %v2686 = vsel %vm2685, %v2678, %v2682
        %v2687 = vand.u32 2147483647, %v2212
        %vm2688 = vcmp.eq.f32.partialorder %v2687, 8.507059e+37
        %v2689 = vand.u32 %v2212, 2147483648
        %v2690 = vor.u32 1.1754944e-38, %v2689
        %v2691 = vsel %vm2688, %v2690, %v2686
        %v2692 = vmul.f32 1.0, %v2691
        %v2693 = vmul.f32 %v1990, %v2227
        %v2694 = vmul.f32 %v1993, %v2242
        %v2695 = vmul.f32 %v1996, %v2257
        %v2696 = vmul.f32 %v1999, %v2272
        %v2697 = vmul.f32 %v2002, %v2287
        %v2698 = vmul.f32 %v2005, %v2302
        %v2699 = vmul.f32 %v2008, %v2317
        %v2700 = vmul.f32 %v2011, %v2332
        %v2701 = vmul.f32 %v2014, %v2347
        %v2702 = vmul.f32 %v2017, %v2362
        %v2703 = vmul.f32 %v2020, %v2377
        %v2704 = vmul.f32 %v2023, %v2392
        %v2705 = vmul.f32 %v2026, %v2407
        %v2706 = vmul.f32 %v2029, %v2422
        %v2707 = vmul.f32 %v2032, %v2437
        %v2708 = vmul.f32 %v2035, %v2452
        %v2709 = vmul.f32 %v2038, %v2467
        %v2710 = vmul.f32 %v2041, %v2482
        %v2711 = vmul.f32 %v2044, %v2497
        %v2712 = vmul.f32 %v2047, %v2512
        %v2713 = vmul.f32 %v2050, %v2527
        %v2714 = vmul.f32 %v2053, %v2542
        %v2715 = vmul.f32 %v2056, %v2557
        %v2716 = vmul.f32 %v2059, %v2572
        %v2717 = vmul.f32 %v2062, %v2587
        %v2718 = vmul.f32 %v2065, %v2602
        %v2719 = vmul.f32 %v2068, %v2617
        %v2720 = vmul.f32 %v2071, %v2632
        %v2721 = vmul.f32 %v2074, %v2647
        %v2722 = vmul.f32 %v2077, %v2662
        %v2723 = vmul.f32 %v2080, %v2677
        %v2724 = vmul.f32 %v2083, %v2692
        %2725 = vst [vmem:[%s217] sm:$0xff] %v2693
        %2726 = vst [vmem:[%s217 + $0x8] sm:$0xff] %v2694
        %2727 = vst [vmem:[%s217 + $0x10] sm:$0xff] %v2695
        %2728 = vst [vmem:[%s217 + $0x18] sm:$0xff] %v2696
        %2729 = vst [vmem:[%s217 + $0x20] sm:$0xff] %v2697
        %2730 = vst [vmem:[%s217 + $0x28] sm:$0xff] %v2698
        %2731 = vst [vmem:[%s217 + $0x30] sm:$0xff] %v2699
        %2732 = vst [vmem:[%s217 + $0x38] sm:$0xff] %v2700
        %2733 = vst [vmem:[%s217 + $0x40] sm:$0xff] %v2701
        %2734 = vst [vmem:[%s217 + $0x48] sm:$0xff] %v2702
        %2735 = vst [vmem:[%s217 + $0x50] sm:$0xff] %v2703
        %2736 = vst [vmem:[%s217 + $0x58] sm:$0xff] %v2704
        %2737 = vst [vmem:[%s217 + $0x60] sm:$0xff] %v2705
        %2738 = vst [vmem:[%s217 + $0x68] sm:$0xff] %v2706
        %2739 = vst [vmem:[%s217 + $0x70] sm:$0xff] %v2707
        %2740 = vst [vmem:[%s217 + $0x78] sm:$0xff] %v2708
        %2741 = vst [vmem:[%s217 + $0x80] sm:$0xff] %v2709
        %2742 = vst [vmem:[%s217 + $0x88] sm:$0xff] %v2710
        %2743 = vst [vmem:[%s217 + $0x90] sm:$0xff] %v2711
        %2744 = vst [vmem:[%s217 + $0x98] sm:$0xff] %v2712
        %2745 = vst [vmem:[%s217 + $0xa0] sm:$0xff] %v2713
        %2746 = vst [vmem:[%s217 + $0xa8] sm:$0xff] %v2714
        %2747 = vst [vmem:[%s217 + $0xb0] sm:$0xff] %v2715
        %2748 = vst [vmem:[%s217 + $0xb8] sm:$0xff] %v2716
        %2749 = vst [vmem:[%s217 + $0xc0] sm:$0xff] %v2717
        %2750 = vst [vmem:[%s217 + $0xc8] sm:$0xff] %v2718
        %2751 = vst [vmem:[%s217 + $0xd0] sm:$0xff] %v2719
        %2752 = vst [vmem:[%s217 + $0xd8] sm:$0xff] %v2720
        %2753 = vst [vmem:[%s217 + $0xe0] sm:$0xff] %v2721
        %2754 = vst [vmem:[%s217 + $0xe8] sm:$0xff] %v2722
        %2755 = vst [vmem:[%s217 + $0xf0] sm:$0xff] %v2723
        %2756 = vst [vmem:[%s217 + $0xf8] sm:$0xff] %v2724
        %s2757 = sand.u32 %s137, 1
        %s2758 = scalar_lea.sflag [#allocation5], %s2757
        %s2759 = sand.u32 %s137, 1
        %s2760 = smul.addr %s2759, 256
        %s2761 = scalar_lea.vmem [#allocation4], %s2760
        // Predicated region
        $region41: #{tpu_custom_call.1} parent=39 // pred_check
          %p2762 = pneg %p147
        $region42: #{tpu_custom_call.1} parent=39 // pred_check_branch
          %2764 = sbr.rel (%p2762) target = $region44
        $region43: #{tpu_custom_call.1} parent=39 // pred_region
          %2766 = vsyncadd %s2758, 0
          %s2767 = smul.addr %s19, 32
          %s2768 = smul.addr %s2767, 8
          %s2769 = scalar_lea.hbm %s5, %s2768
          %s2770 = sshll.u32 %s2761, 4
          %s2771 = int_to_ptr.vmem [resolvable:$true] %s2770
          %s2772 = sshll.u32 %s2769, 4
          %s2773 = int_to_ptr.hbm [resolvable:$true] %s2772
          %2778 = dma.vmem_to_hbm [thread:$0]  %s2771, 4096, %s2773, %s2758, 128, 128, 8
        $region44: #{tpu_custom_call.1} parent=39 // pred_fallthru
          _
      $region40: #{tpu_custom_call.1} parent=5 // pred_fallthru
        _
      %p2779 = scmp.le.s32.totalorder 2, %s14
      // Predicated region
      $region45: #{tpu_custom_call.1} parent=5 // pred_check
        %p2780 = pneg %p2779
      $region46: #{tpu_custom_call.1} parent=5 // pred_check_branch
        %2782 = sbr.rel (%p2780) target = $region48
      $region47: #{tpu_custom_call.1} parent=5 // pred_region
        %s2783 = ssub.s32 %s14, 2
        // Predicated region
        $region49: #{tpu_custom_call.1} parent=47 // pred_check
          %p2784 = pneg %p153
        $region50: #{tpu_custom_call.1} parent=47 // pred_check_branch
          %2786 = sbr.rel (%p2784) target = $region52
        $region51: #{tpu_custom_call.1} parent=47 // pred_region
          %s2787 = sand.u32 %s138, 1
          %s2788 = scalar_lea.sflag [#allocation5], %s2787
          %s2789 = sand.u32 %s138, 1
          %s2790 = smul.addr %s2789, 256
          %s2791 = scalar_lea.vmem [#allocation4], %s2790
          %2793 = dma.done %s2788, 4096
        $region52: #{tpu_custom_call.1} parent=47 // pred_fallthru
          _
      $region48: #{tpu_custom_call.1} parent=5 // pred_fallthru
        _
    $region6: #{tpu_custom_call.1} parent=1 // loop_footer
      %s18 = sadd.s32 1, %s14
    $region7: #{tpu_custom_call.1} parent=1 // loop_footer_branch
      %13 = sbr.rel target = $region3
    $region8: #{tpu_custom_call.1} parent=1 // loop_exit
      _
    %2794 = vsyncpa [#allocation5], 1
    %s2795 = scalar_lea.sflag [#allocation5], 1
    %2796 = vsyncpa %s2795, 1

</llo_original>
